<compile_context>
chip_gen: v7x
topology: tpu7x:2x2x1
jax: 0.10.0
libtpu: 0.0.40
codegen_flags: <defaults>
</compile_context>

<pallas_src>
import math

import jax
import jax.numpy as jnp
from jax.experimental import pallas as pl
from jax.experimental.pallas import tpu as pltpu

DIM_OBS = 3          # position features / output features
DIM_ACT = 2          # action features
DIM_HID = 10         # true hidden width
DIM_IN = DIM_OBS + DIM_ACT

HID_PAD = 128        # hidden width padded to a full lane register
TILE_B = 512         # max batch rows per grid step (multiple of 8 sublanes)


# ---------------------------------------------------------------------------
# Kernel: one batch tile of `tile` rows.
#   pos_ref : (tile, DIM_OBS)     act_ref : (tile, DIM_ACT)
#   w1p_ref : (DIM_OBS, HID_PAD)  w1a_ref : (DIM_ACT, HID_PAD)
#   b1_ref  : (1, HID_PAD)
#   w2_ref  : (HID_PAD, DIM_OBS)  b2_ref  : (1, DIM_OBS)
#   o_ref   : (tile, DIM_OBS)     (unpadded -- real 3-lane output)
# ---------------------------------------------------------------------------
def predictor_kernel(pos_ref, act_ref, w1p_ref, w1a_ref, b1_ref,
                     w2_ref, b2_ref, o_ref):
    pos = pos_ref[...]
    act = act_ref[...]

    # First linear layer with the concat fused away:
    #   h = [pos, act] @ W1 + b1  ==  pos @ W1[:3] + act @ W1[3:] + b1
    h = (jnp.dot(pos, w1p_ref[...], preferred_element_type=jnp.float32)
         + jnp.dot(act, w1a_ref[...], preferred_element_type=jnp.float32)
         + b1_ref[...])
    h = jnp.maximum(h, 0.0)                                    # ReLU

    # Second linear layer; residual + bias added on the VPU (exact, no MXU
    # rounding on the residual path).
    y = jnp.dot(h, w2_ref[...], preferred_element_type=jnp.float32)
    o_ref[...] = y + pos + b2_ref[...]


# ---------------------------------------------------------------------------
# Parameters
# ---------------------------------------------------------------------------
def init_params(key):
    """PyTorch-Linear-style U(-1/sqrt(fan_in), ...) init, original shapes."""
    k1, k2, k3, k4 = jax.random.split(key, 4)
    bound1 = 1.0 / math.sqrt(DIM_IN)
    bound2 = 1.0 / math.sqrt(DIM_HID)
    w1 = jax.random.uniform(k1, (DIM_IN, DIM_HID), jnp.float32, -bound1, bound1)
    b1 = jax.random.uniform(k2, (DIM_HID,), jnp.float32, -bound1, bound1)
    w2 = jax.random.uniform(k3, (DIM_HID, DIM_OBS), jnp.float32, -bound2, bound2)
    b2 = jax.random.uniform(k4, (DIM_OBS,), jnp.float32, -bound2, bound2)
    return (w1, b1, w2, b2)


def prepare_params(params):
    """One-time repack into the kernel's split / hidden-lane-padded layout."""
    w1, b1, w2, b2 = params
    w1 = w1.astype(jnp.float32)
    w1p = jnp.zeros((DIM_OBS, HID_PAD), jnp.float32).at[:, :DIM_HID].set(w1[:DIM_OBS])
    w1a = jnp.zeros((DIM_ACT, HID_PAD), jnp.float32).at[:, :DIM_HID].set(w1[DIM_OBS:])
    b1p = jnp.zeros((1, HID_PAD), jnp.float32).at[0, :DIM_HID].set(b1.astype(jnp.float32))
    w2p = jnp.zeros((HID_PAD, DIM_OBS), jnp.float32).at[:DIM_HID, :].set(
        w2.astype(jnp.float32))
    b2p = b2.astype(jnp.float32).reshape(1, DIM_OBS)
    return (w1p, w1a, b1p, w2p, b2p)


# ---------------------------------------------------------------------------
# Forward
# ---------------------------------------------------------------------------
def _choose_tile(b):
    """Pick a batch tile: <= TILE_B, multiple of 8 sublanes, and (when the
    batch allows it) at least 2 grid steps so v7x's two TensorCores both get
    work via the "parallel" grid axis."""
    if b <= 16:
        return b                      # single full-extent block (always legal)
    half = -(-b // 2)                 # cdiv(b, 2)
    half = -(-half // 8) * 8          # round up to a sublane multiple
    return min(TILE_B, half)


def predictor_forward_batched(position, action, prepared):
    """position: (B, DIM_OBS), action: (B, DIM_ACT) -> (B, DIM_OBS), float32."""
    position = position.astype(jnp.float32)
    action = action.astype(jnp.float32)
    b = position.shape[0]
    tile = _choose_tile(b)
    grid = (pl.cdiv(b, tile),)        # ragged last block handled by Pallas
                                      # (pad-on-read / discard-on-write)

    w1p, w1a, b1p, w2p, b2p = prepared
    const = lambda i: (0, 0)          # weight blocks: loaded once, VMEM-resident
    batched = lambda i: (i, 0)

    out = pl.pallas_call(
        predictor_kernel,
        out_shape=jax.ShapeDtypeStruct((b, DIM_OBS), jnp.float32),
        grid=grid,
        in_specs=[
            pl.BlockSpec((tile, DIM_OBS), batched),     # position
            pl.BlockSpec((tile, DIM_ACT), batched),     # action
            pl.BlockSpec((DIM_OBS, HID_PAD), const),    # W1 (position part)
            pl.BlockSpec((DIM_ACT, HID_PAD), const),    # W1 (action part)
            pl.BlockSpec((1, HID_PAD), const),          # b1
            pl.BlockSpec((HID_PAD, DIM_OBS), const),    # W2
            pl.BlockSpec((1, DIM_OBS), const),          # b2
        ],
        out_specs=pl.BlockSpec((tile, DIM_OBS), batched),
        compiler_params=pltpu.CompilerParams(dimension_semantics=("parallel",)),
    )(position, action, w1p, w1a, b1p, w2p, b2p)
    return out


def predictor_forward(position, action, params):
    """Single-sample forward matching the original module: (3,), (2,) -> (3,).

    Per perf review: a B=1 pallas_call pays the full launch + DMA fixed cost
    for a 1x5 matmul, so plain XLA is strictly faster here.  Batch requests and
    use `predictor_forward_batched` (the Pallas kernel) for real throughput.
    """
    w1, b1, w2, b2 = params
    x = jnp.concatenate([position.astype(jnp.float32),
                         action.astype(jnp.float32)])
    return jnp.maximum(x @ w1 + b1, 0.0) @ w2 + b2 + x[:DIM_OBS]


if __name__ == "__main__":
    key = jax.random.PRNGKey(0)
    kparam, kpos, kact = jax.random.split(key, 3)
    params = init_params(kparam)
    prepared = prepare_params(params)

    B = 1024                                  # 2 grid steps of 512 rows each
    position = jax.random.normal(kpos, (B, DIM_OBS), jnp.float32)
    action = jax.random.normal(kact, (B, DIM_ACT), jnp.float32)

    out = predictor_forward_batched(position, action, prepared)
    jax.block_until_ready(out)

    # Pure-JAX reference of the original module math, applied per row.
    w1, b1, w2, b2 = params
    x = jnp.concatenate([position, action], axis=-1)
    ref = jnp.maximum(x @ w1 + b1, 0.0) @ w2 + b2 + position
    assert out.shape == (B, DIM_OBS)
    assert jnp.allclose(out, ref, atol=1e-5, rtol=1e-5)

    # Single-sample path (original forward signature) also matches.
    out1 = predictor_forward(position[0], action[0], params)
    jax.block_until_ready(out1)
    assert out1.shape == (DIM_OBS,)
    assert jnp.allclose(out1, ref[0], atol=1e-5, rtol=1e-5)

    print("KERNEL_OK")
</pallas_src>

<mosaic_0001>
module attributes {stable_mosaic.version = 11 : i64} {
  func.func @predictor_kernel(%arg0: i32, %arg1: memref<512x3xf32, #tpu.memory_space<vmem>>, %arg2: memref<512x2xf32, #tpu.memory_space<vmem>>, %arg3: memref<3x128xf32, #tpu.memory_space<vmem>>, %arg4: memref<2x128xf32, #tpu.memory_space<vmem>>, %arg5: memref<1x128xf32, #tpu.memory_space<vmem>>, %arg6: memref<128x3xf32, #tpu.memory_space<vmem>>, %arg7: memref<1x3xf32, #tpu.memory_space<vmem>>, %arg8: memref<512x3xf32, #tpu.memory_space<vmem>>) attributes {dimension_semantics = [#tpu.dimension_semantics<parallel>], iteration_bounds = array<i64: 2>, scalar_prefetch = 0 : i64, scratch_operands = 0 : i64, tpu.core_type = #tpu.core_type<tc>, window_params = [{transform_indices = @transform_0, window_bounds = array<i64: 512, 3>}, {transform_indices = @transform_1, window_bounds = array<i64: 512, 2>}, {pipeline_mode = #tpu.pipeline_mode<synchronous>, transform_indices = @transform_2, window_bounds = array<i64: 3, 128>}, {pipeline_mode = #tpu.pipeline_mode<synchronous>, transform_indices = @transform_3, window_bounds = array<i64: 2, 128>}, {pipeline_mode = #tpu.pipeline_mode<synchronous>, transform_indices = @transform_4, window_bounds = array<i64: 1, 128>}, {pipeline_mode = #tpu.pipeline_mode<synchronous>, transform_indices = @transform_5, window_bounds = array<i64: 128, 3>}, {pipeline_mode = #tpu.pipeline_mode<synchronous>, transform_indices = @transform_6, window_bounds = array<i64: 1, 3>}, {transform_indices = @transform_7, window_bounds = array<i64: 512, 3>}]} {
    %c0 = arith.constant 0 : index
    %c0_0 = arith.constant 0 : index
    %0 = vector.load %arg1[%c0, %c0_0] : memref<512x3xf32, #tpu.memory_space<vmem>>, vector<512x3xf32>
    %c0_1 = arith.constant 0 : index
    %c0_2 = arith.constant 0 : index
    %1 = vector.load %arg2[%c0_1, %c0_2] : memref<512x2xf32, #tpu.memory_space<vmem>>, vector<512x2xf32>
    %c0_3 = arith.constant 0 : index
    %c0_4 = arith.constant 0 : index
    %2 = vector.load %arg3[%c0_3, %c0_4] : memref<3x128xf32, #tpu.memory_space<vmem>>, vector<3x128xf32>
    %cst = arith.constant dense<0.000000e+00> : vector<512x128xf32>
    %3 = tpu.matmul %0, %2, %cst {dimension_numbers = #tpu.dot_dimension_numbers<[1], [0], [0], [1], [0, 0, 1, 1], [], []>} : vector<512x3xf32>, vector<3x128xf32>, vector<512x128xf32> -> vector<512x128xf32>
    %c0_5 = arith.constant 0 : index
    %c0_6 = arith.constant 0 : index
    %4 = vector.load %arg4[%c0_5, %c0_6] : memref<2x128xf32, #tpu.memory_space<vmem>>, vector<2x128xf32>
    %cst_7 = arith.constant dense<0.000000e+00> : vector<512x128xf32>
    %5 = tpu.matmul %1, %4, %cst_7 {dimension_numbers = #tpu.dot_dimension_numbers<[1], [0], [0], [1], [0, 0, 1, 1], [], []>} : vector<512x2xf32>, vector<2x128xf32>, vector<512x128xf32> -> vector<512x128xf32>
    %6 = arith.addf %3, %5 : vector<512x128xf32>
    %c0_8 = arith.constant 0 : index
    %c0_9 = arith.constant 0 : index
    %7 = vector.load %arg5[%c0_8, %c0_9] : memref<1x128xf32, #tpu.memory_space<vmem>>, vector<1x128xf32>
    %8 = vector.broadcast %7 : vector<1x128xf32> to vector<512x128xf32>
    %9 = arith.addf %6, %8 : vector<512x128xf32>
    %cst_10 = arith.constant 0.000000e+00 : f32
    %10 = vector.broadcast %cst_10 : f32 to vector<512x128xf32>
    %11 = arith.maximumf %9, %10 : vector<512x128xf32>
    %c0_11 = arith.constant 0 : index
    %c0_12 = arith.constant 0 : index
    %12 = vector.load %arg6[%c0_11, %c0_12] : memref<128x3xf32, #tpu.memory_space<vmem>>, vector<128x3xf32>
    %cst_13 = arith.constant dense<0.000000e+00> : vector<512x3xf32>
    %13 = tpu.matmul %11, %12, %cst_13 {dimension_numbers = #tpu.dot_dimension_numbers<[1], [0], [0], [1], [0, 0, 1, 1], [], []>} : vector<512x128xf32>, vector<128x3xf32>, vector<512x3xf32> -> vector<512x3xf32>
    %14 = arith.addf %13, %0 : vector<512x3xf32>
    %c0_14 = arith.constant 0 : index
    %c0_15 = arith.constant 0 : index
    %15 = vector.load %arg7[%c0_14, %c0_15] : memref<1x3xf32, #tpu.memory_space<vmem>>, vector<1x3xf32>
    %16 = vector.broadcast %15 : vector<1x3xf32> to vector<512x3xf32>
    %17 = arith.addf %14, %16 : vector<512x3xf32>
    %c0_16 = arith.constant 0 : index
    %c0_17 = arith.constant 0 : index
    %18 = vector.load %arg8[%c0_16, %c0_17] : memref<512x3xf32, #tpu.memory_space<vmem>>, vector<512x3xf32>
    tpu.vector_store %arg8[%c0_16, %c0_17], %17 {strides = array<i32>} : memref<512x3xf32, #tpu.memory_space<vmem>>, vector<512x3xf32>,
    return
  }
  func.func @transform_0(%arg0: i32) -> (i32, i32) {
    %c0_i32 = arith.constant 0 : i32
    %c0_i32_0 = arith.constant 0 : i32
    return %arg0, %c0_i32 : i32, i32
  }
  func.func @transform_1(%arg0: i32) -> (i32, i32) {
    %c0_i32 = arith.constant 0 : i32
    %c0_i32_0 = arith.constant 0 : i32
    return %arg0, %c0_i32 : i32, i32
  }
  func.func @transform_2(%arg0: i32) -> (i32, i32) {
    %c0_i32 = arith.constant 0 : i32
    %c0_i32_0 = arith.constant 0 : i32
    %c0_i32_1 = arith.constant 0 : i32
    return %c0_i32, %c0_i32_0 : i32, i32
  }
  func.func @transform_3(%arg0: i32) -> (i32, i32) {
    %c0_i32 = arith.constant 0 : i32
    %c0_i32_0 = arith.constant 0 : i32
    %c0_i32_1 = arith.constant 0 : i32
    return %c0_i32, %c0_i32_0 : i32, i32
  }
  func.func @transform_4(%arg0: i32) -> (i32, i32) {
    %c0_i32 = arith.constant 0 : i32
    %c0_i32_0 = arith.constant 0 : i32
    %c0_i32_1 = arith.constant 0 : i32
    return %c0_i32, %c0_i32_0 : i32, i32
  }
  func.func @transform_5(%arg0: i32) -> (i32, i32) {
    %c0_i32 = arith.constant 0 : i32
    %c0_i32_0 = arith.constant 0 : i32
    %c0_i32_1 = arith.constant 0 : i32
    return %c0_i32, %c0_i32_0 : i32, i32
  }
  func.func @transform_6(%arg0: i32) -> (i32, i32) {
    %c0_i32 = arith.constant 0 : i32
    %c0_i32_0 = arith.constant 0 : i32
    %c0_i32_1 = arith.constant 0 : i32
    return %c0_i32, %c0_i32_0 : i32, i32
  }
  func.func @transform_7(%arg0: i32) -> (i32, i32) {
    %c0_i32 = arith.constant 0 : i32
    %c0_i32_0 = arith.constant 0 : i32
    return %arg0, %c0_i32 : i32, i32
  }
}

</mosaic_0001>

<llo_original>
// kernel: tpu_custom_call.1
$region0: #{tpu_custom_call.1}
  #allocation0 [shape = 'u32[]', space=smem, size = 0x4, offset = 0x4, fixed_abs, tag = 'smem constant byte address 0x4 - core index']
  #allocation1 [shape = 'u32[144,128]{1,0:T(1,128)}', space=vmem, size = 0x12000, scoped, tag = 'internal scratch']
  %s0 = inlined_call_operand.vmem [shape: f32[1024,3], index: 0, kind: input, shape index: {}]
  %s1 = inlined_call_operand.vmem [shape: f32[1024,2], index: 1, kind: input, shape index: {}]
  %s2 = inlined_call_operand.vmem [shape: f32[3,128], index: 2, kind: input, shape index: {}]
  %s3 = inlined_call_operand.vmem [shape: f32[2,128], index: 3, kind: input, shape index: {}]
  %s4 = inlined_call_operand.vmem [shape: f32[1,128], index: 4, kind: input, shape index: {}]
  %s5 = inlined_call_operand.vmem [shape: f32[128,3], index: 5, kind: input, shape index: {}]
  %s6 = inlined_call_operand.vmem [shape: f32[1,3], index: 6, kind: input, shape index: {}]
  %s7 = inlined_call_operand.vmem [shape: f32[1024,3], index: 7, kind: output, shape index: {}]
  %s8 = sld [smem:[#allocation0]]
  $region61: #{tpu_custom_call.1} parent=0
    _
  %s10 = ssub.s32 1, %s8
  %s11 = scalar_select 0, %s10, %s8
  loop: start=0, step=1, limit=4
  $region2: #{tpu_custom_call.1} parent=0 // loop_pre_header
    _
  $region3: #{tpu_custom_call.1} parent=0 // loop_header
    %s13 = sphi 0, %s17
    %p14 = scmp.ge.s32.totalorder %s13, 4
    %s23 = sphi 0, %s25
    %s26 = sphi 0, %s23
    %s27 = sphi 0, %s26
    %s43 = sphi 0, %s27
    %s49 = sphi 0, %s51
    %s52 = sphi 0, %s49
    %s53 = sphi 0, %s52
    %s69 = sphi 0, %s53
    %s73 = sphi 0, %s73
    %s75 = sphi 0, %s73
    %s76 = sphi 0, %s75
    %s90 = sphi 0, %s76
    %s94 = sphi 0, %s94
    %s96 = sphi 0, %s94
    %s97 = sphi 0, %s96
    %s111 = sphi 0, %s97
    %s115 = sphi 0, %s115
    %s117 = sphi 0, %s115
    %s118 = sphi 0, %s117
    %s132 = sphi 0, %s118
    %s136 = sphi 0, %s136
    %s138 = sphi 0, %s136
    %s139 = sphi 0, %s138
    %s153 = sphi 0, %s139
    %s157 = sphi 0, %s157
    %s159 = sphi 0, %s157
    %s160 = sphi 0, %s159
    %s174 = sphi 0, %s160
    %s180 = sphi 0, %s182
    %s183 = sphi 0, %s180
    %s184 = sphi 0, %s183
    %s200 = sphi 0, %s184
  $region4: #{tpu_custom_call.1} parent=0 // loop_header_branch
    %16 = sbr.rel (%p14) target = $region8
  $region5: #{tpu_custom_call.1} parent=0 // loop_body
    %s18 = ssub.s32 %s13, 1
    %s19 = ssub.s32 %s13, 2
    %s20 = sadd.s32 %s13, 1
    %s21 = ssub.s32 %s13, %s20
    %p22 = scmp.eq.s32.totalorder %s21, 0
    %s24 = sadd.s32 %s23, 1
    %s25 = scalar_select %p22, %s23, %s24
    %p28 = pneg %p22
    %p29 = scmp.eq.s32.totalorder %s13, 1
    %p30 = por %p28, %p29
    %p31 = scmp.ne.s32.totalorder %s23, %s26
    %p32 = scmp.eq.s32.totalorder %s13, 0
    %p33 = por %p31, %p32
    %p34 = scmp.ne.s32.totalorder %s23, %s26
    %p35 = scmp.eq.s32.totalorder %s18, 1
    %p36 = por %p34, %p35
    %p37 = scmp.ne.s32.totalorder %s26, %s27
    %p38 = scmp.eq.s32.totalorder %s18, 0
    %p39 = por %p37, %p38
    %p40 = scmp.ne.s32.totalorder %s26, %s27
    %p41 = scmp.eq.s32.totalorder %s19, 1
    %p42 = por %p40, %p41
    %p44 = scmp.ne.s32.totalorder %s27, %s43
    %p45 = scmp.eq.s32.totalorder %s19, 0
    %p46 = por %p44, %p45
    %s47 = ssub.s32 %s13, %s20
    %p48 = scmp.eq.s32.totalorder %s47, 0
    %s50 = sadd.s32 %s49, 1
    %s51 = scalar_select %p48, %s49, %s50
    %p54 = pneg %p48
    %p55 = scmp.eq.s32.totalorder %s13, 1
    %p56 = por %p54, %p55
    %p57 = scmp.ne.s32.totalorder %s49, %s52
    %p58 = scmp.eq.s32.totalorder %s13, 0
    %p59 = por %p57, %p58
    %p60 = scmp.ne.s32.totalorder %s49, %s52
    %p61 = scmp.eq.s32.totalorder %s18, 1
    %p62 = por %p60, %p61
    %p63 = scmp.ne.s32.totalorder %s52, %s53
    %p64 = scmp.eq.s32.totalorder %s18, 0
    %p65 = por %p63, %p64
    %p66 = scmp.ne.s32.totalorder %s52, %s53
    %p67 = scmp.eq.s32.totalorder %s19, 1
    %p68 = por %p66, %p67
    %p70 = scmp.ne.s32.totalorder %s53, %s69
    %p71 = scmp.eq.s32.totalorder %s19, 0
    %p72 = por %p70, %p71
    %s74 = sadd.s32 %s73, 1
    %p77 = scmp.eq.s32.totalorder %s13, 1
    %p78 = scmp.ne.s32.totalorder %s73, %s75
    %p79 = scmp.eq.s32.totalorder %s13, 0
    %p80 = por %p78, %p79
    %p81 = scmp.ne.s32.totalorder %s73, %s75
    %p82 = scmp.eq.s32.totalorder %s18, 1
    %p83 = por %p81, %p82
    %p84 = scmp.ne.s32.totalorder %s75, %s76
    %p85 = scmp.eq.s32.totalorder %s18, 0
    %p86 = por %p84, %p85
    %p87 = scmp.ne.s32.totalorder %s75, %s76
    %p88 = scmp.eq.s32.totalorder %s19, 1
    %p89 = por %p87, %p88
    %p91 = scmp.ne.s32.totalorder %s76, %s90
    %p92 = scmp.eq.s32.totalorder %s19, 0
    %p93 = por %p91, %p92
    %s95 = sadd.s32 %s94, 1
    %p98 = scmp.eq.s32.totalorder %s13, 1
    %p99 = scmp.ne.s32.totalorder %s94, %s96
    %p100 = scmp.eq.s32.totalorder %s13, 0
    %p101 = por %p99, %p100
    %p102 = scmp.ne.s32.totalorder %s94, %s96
    %p103 = scmp.eq.s32.totalorder %s18, 1
    %p104 = por %p102, %p103
    %p105 = scmp.ne.s32.totalorder %s96, %s97
    %p106 = scmp.eq.s32.totalorder %s18, 0
    %p107 = por %p105, %p106
    %p108 = scmp.ne.s32.totalorder %s96, %s97
    %p109 = scmp.eq.s32.totalorder %s19, 1
    %p110 = por %p108, %p109
    %p112 = scmp.ne.s32.totalorder %s97, %s111
    %p113 = scmp.eq.s32.totalorder %s19, 0
    %p114 = por %p112, %p113
    %s116 = sadd.s32 %s115, 1
    %p119 = scmp.eq.s32.totalorder %s13, 1
    %p120 = scmp.ne.s32.totalorder %s115, %s117
    %p121 = scmp.eq.s32.totalorder %s13, 0
    %p122 = por %p120, %p121
    %p123 = scmp.ne.s32.totalorder %s115, %s117
    %p124 = scmp.eq.s32.totalorder %s18, 1
    %p125 = por %p123, %p124
    %p126 = scmp.ne.s32.totalorder %s117, %s118
    %p127 = scmp.eq.s32.totalorder %s18, 0
    %p128 = por %p126, %p127
    %p129 = scmp.ne.s32.totalorder %s117, %s118
    %p130 = scmp.eq.s32.totalorder %s19, 1
    %p131 = por %p129, %p130
    %p133 = scmp.ne.s32.totalorder %s118, %s132
    %p134 = scmp.eq.s32.totalorder %s19, 0
    %p135 = por %p133, %p134
    %s137 = sadd.s32 %s136, 1
    %p140 = scmp.eq.s32.totalorder %s13, 1
    %p141 = scmp.ne.s32.totalorder %s136, %s138
    %p142 = scmp.eq.s32.totalorder %s13, 0
    %p143 = por %p141, %p142
    %p144 = scmp.ne.s32.totalorder %s136, %s138
    %p145 = scmp.eq.s32.totalorder %s18, 1
    %p146 = por %p144, %p145
    %p147 = scmp.ne.s32.totalorder %s138, %s139
    %p148 = scmp.eq.s32.totalorder %s18, 0
    %p149 = por %p147, %p148
    %p150 = scmp.ne.s32.totalorder %s138, %s139
    %p151 = scmp.eq.s32.totalorder %s19, 1
    %p152 = por %p150, %p151
    %p154 = scmp.ne.s32.totalorder %s139, %s153
    %p155 = scmp.eq.s32.totalorder %s19, 0
    %p156 = por %p154, %p155
    %s158 = sadd.s32 %s157, 1
    %p161 = scmp.eq.s32.totalorder %s13, 1
    %p162 = scmp.ne.s32.totalorder %s157, %s159
    %p163 = scmp.eq.s32.totalorder %s13, 0
    %p164 = por %p162, %p163
    %p165 = scmp.ne.s32.totalorder %s157, %s159
    %p166 = scmp.eq.s32.totalorder %s18, 1
    %p167 = por %p165, %p166
    %p168 = scmp.ne.s32.totalorder %s159, %s160
    %p169 = scmp.eq.s32.totalorder %s18, 0
    %p170 = por %p168, %p169
    %p171 = scmp.ne.s32.totalorder %s159, %s160
    %p172 = scmp.eq.s32.totalorder %s19, 1
    %p173 = por %p171, %p172
    %p175 = scmp.ne.s32.totalorder %s160, %s174
    %p176 = scmp.eq.s32.totalorder %s19, 0
    %p177 = por %p175, %p176
    %s178 = ssub.s32 %s13, %s20
    %p179 = scmp.eq.s32.totalorder %s178, 0
    %s181 = sadd.s32 %s180, 1
    %s182 = scalar_select %p179, %s180, %s181
    %p185 = pneg %p179
    %p186 = scmp.eq.s32.totalorder %s13, 1
    %p187 = por %p185, %p186
    %p188 = scmp.ne.s32.totalorder %s180, %s183
    %p189 = scmp.eq.s32.totalorder %s13, 0
    %p190 = por %p188, %p189
    %p191 = scmp.ne.s32.totalorder %s180, %s183
    %p192 = scmp.eq.s32.totalorder %s18, 1
    %p193 = por %p191, %p192
    %p194 = scmp.ne.s32.totalorder %s183, %s184
    %p195 = scmp.eq.s32.totalorder %s18, 0
    %p196 = por %p194, %p195
    %p197 = scmp.ne.s32.totalorder %s183, %s184
    %p198 = scmp.eq.s32.totalorder %s19, 1
    %p199 = por %p197, %p198
    %p201 = scmp.ne.s32.totalorder %s184, %s200
    %p202 = scmp.eq.s32.totalorder %s19, 0
    %p203 = por %p201, %p202
    %p204 = scmp.le.s32.totalorder 1, %s13
    %p205 = scmp.lt.s32.totalorder %s13, 3
    %p206 = pnand %p204, %p205
    %p207 = pneg %p206
    // Predicated region
    $region9: #{tpu_custom_call.1} parent=5 // pred_check
      _
    $region10: #{tpu_custom_call.1} parent=5 // pred_check_branch
      %209 = sbr.rel (%p206) target = $region12
    $region11: #{tpu_custom_call.1} parent=5 // pred_region
      %s210 = ssub.s32 %s13, 1
      // Predicated region
      $region13: #{tpu_custom_call.1} parent=11 // pred_check
        %p211 = pneg %p86
      $region14: #{tpu_custom_call.1} parent=11 // pred_check_branch
        %213 = sbr.rel (%p211) target = $region16
      $region15: #{tpu_custom_call.1} parent=11 // pred_region
        _
      $region16: #{tpu_custom_call.1} parent=11 // pred_fallthru
        _
      // Predicated region
      $region17: #{tpu_custom_call.1} parent=11 // pred_check
        %p214 = pneg %p107
      $region18: #{tpu_custom_call.1} parent=11 // pred_check_branch
        %216 = sbr.rel (%p214) target = $region20
      $region19: #{tpu_custom_call.1} parent=11 // pred_region
        _
      $region20: #{tpu_custom_call.1} parent=11 // pred_fallthru
        _
      // Predicated region
      $region21: #{tpu_custom_call.1} parent=11 // pred_check
        %p217 = pneg %p128
      $region22: #{tpu_custom_call.1} parent=11 // pred_check_branch
        %219 = sbr.rel (%p217) target = $region24
      $region23: #{tpu_custom_call.1} parent=11 // pred_region
        _
      $region24: #{tpu_custom_call.1} parent=11 // pred_fallthru
        _
      // Predicated region
      $region25: #{tpu_custom_call.1} parent=11 // pred_check
        %p220 = pneg %p149
      $region26: #{tpu_custom_call.1} parent=11 // pred_check_branch
        %222 = sbr.rel (%p220) target = $region28
      $region27: #{tpu_custom_call.1} parent=11 // pred_region
        _
      $region28: #{tpu_custom_call.1} parent=11 // pred_fallthru
        _
      // Predicated region
      $region29: #{tpu_custom_call.1} parent=11 // pred_check
        %p223 = pneg %p170
      $region30: #{tpu_custom_call.1} parent=11 // pred_check_branch
        %225 = sbr.rel (%p223) target = $region32
      $region31: #{tpu_custom_call.1} parent=11 // pred_region
        _
      $region32: #{tpu_custom_call.1} parent=11 // pred_fallthru
        _
    $region12: #{tpu_custom_call.1} parent=5 // pred_fallthru
      _
    %p226 = scmp.lt.s32.totalorder %s13, 2
    // Predicated region
    $region33: #{tpu_custom_call.1} parent=5 // pred_check
      %p227 = pneg %p226
    $region34: #{tpu_custom_call.1} parent=5 // pred_check_branch
      %229 = sbr.rel (%p227) target = $region36
    $region35: #{tpu_custom_call.1} parent=5 // pred_region
      // Predicated region
      $region37: #{tpu_custom_call.1} parent=35 // pred_check
        %p230 = pneg %p33
      $region38: #{tpu_custom_call.1} parent=35 // pred_check_branch
        %232 = sbr.rel (%p230) target = $region40
      $region39: #{tpu_custom_call.1} parent=35 // pred_region
        %s233 = smul.u32 64, %s13
        %p234 = scmp.lt.s32.totalorder %s233, 127
        %s235 = scalar_select %p234, %s233, 127
        %s236 = smul.addr %s235, 8
        %s237 = scalar_lea.vmem %s0, %s236
        %s238 = smul.u32 64, %s13
      $region40: #{tpu_custom_call.1} parent=35 // pred_fallthru
        _
      // Predicated region
      $region41: #{tpu_custom_call.1} parent=35 // pred_check
        %p239 = pneg %p59
      $region42: #{tpu_custom_call.1} parent=35 // pred_check_branch
        %241 = sbr.rel (%p239) target = $region44
      $region43: #{tpu_custom_call.1} parent=35 // pred_region
        %s242 = smul.u32 64, %s13
        %p243 = scmp.lt.s32.totalorder %s242, 127
        %s244 = scalar_select %p243, %s242, 127
        %s245 = smul.addr %s244, 8
        %s246 = scalar_lea.vmem %s1, %s245
        %s247 = smul.u32 64, %s13
      $region44: #{tpu_custom_call.1} parent=35 // pred_fallthru
        _
    $region36: #{tpu_custom_call.1} parent=5 // pred_fallthru
      _
    %p248 = scmp.le.s32.totalorder 1, %s13
    %p249 = scmp.lt.s32.totalorder %s13, 3
    %p250 = pnand %p248, %p249
    %p251 = pneg %p250
    // Predicated region
    $region45: #{tpu_custom_call.1} parent=5 // pred_check
      _
    $region46: #{tpu_custom_call.1} parent=5 // pred_check_branch
      %253 = sbr.rel (%p250) target = $region48
    $region47: #{tpu_custom_call.1} parent=5 // pred_region
      %s254 = ssub.s32 %s13, 1
      %s255 = smul.u32 64, %s18
      %p256 = scmp.lt.s32.totalorder %s255, 127
      %s257 = scalar_select %p256, %s255, 127
      %s258 = smul.addr %s257, 8
      %s259 = scalar_lea.vmem %s0, %s258
      %p260 = pneg %p39
      %p261 = pneg %p36
      %s262 = smul.u32 64, %s18
      %p263 = scmp.lt.s32.totalorder %s262, 127
      %s264 = scalar_select %p263, %s262, 127
      %s265 = smul.addr %s264, 8
      %s266 = scalar_lea.vmem %s1, %s265
      %p267 = pneg %p65
      %p268 = pneg %p62
      %p269 = pneg %p86
      %p270 = pneg %p83
      %p271 = pneg %p107
      %p272 = pneg %p104
      %p273 = pneg %p128
      %p274 = pneg %p125
      %p275 = pneg %p149
      %p276 = pneg %p146
      %p277 = pneg %p170
      %p278 = pneg %p167
      %p279 = pneg %p196
      %p280 = pneg %p193
      %s281 = smul.u32 64, %s18
      %p282 = scmp.lt.s32.totalorder %s281, 127
      %s283 = scalar_select %p282, %s281, 127
      %s284 = smul.addr %s283, 8
      %s285 = scalar_lea.vmem %s7, %s284
      %s286 = smul.u32 64, %s18
      %p287 = scmp.lt.s32.totalorder %s286, 127
      %s288 = scalar_select %p287, %s286, 127
      %s289 = smul.addr %s288, 8
      %s290 = scalar_lea.vmem %s0, %s289
      %s291 = smul.u32 64, %s18
      %s292 = smul.u32 64, %s18
      %p293 = scmp.lt.s32.totalorder %s292, 127
      %s294 = scalar_select %p293, %s292, 127
      %s295 = smul.addr %s294, 8
      %s296 = scalar_lea.vmem %s1, %s295
      %s297 = smul.u32 64, %s18
      %s298 = smul.u32 64, %s18
      %p299 = scmp.lt.s32.totalorder %s298, 127
      %s300 = scalar_select %p299, %s298, 127
      %s301 = smul.addr %s300, 8
      %s302 = scalar_lea.vmem %s7, %s301
      %s303 = smul.u32 64, %s18
      %v304 = vld [vmem:[%s290] sm:$0xff]
      %v305 = vld [vmem:[%s290 + $0x8] sm:$0xff]
      %v306 = vld [vmem:[%s290 + $0x10] sm:$0xff]
      %v307 = vld [vmem:[%s290 + $0x18] sm:$0xff]
      %v308 = vld [vmem:[%s290 + $0x20] sm:$0xff]
      %v309 = vld [vmem:[%s290 + $0x28] sm:$0xff]
      %v310 = vld [vmem:[%s290 + $0x30] sm:$0xff]
      %v311 = vld [vmem:[%s290 + $0x38] sm:$0xff]
      %v312 = vld [vmem:[%s290 + $0x40] sm:$0xff]
      %v313 = vld [vmem:[%s290 + $0x48] sm:$0xff]
      %v314 = vld [vmem:[%s290 + $0x50] sm:$0xff]
      %v315 = vld [vmem:[%s290 + $0x58] sm:$0xff]
      %v316 = vld [vmem:[%s290 + $0x60] sm:$0xff]
      %v317 = vld [vmem:[%s290 + $0x68] sm:$0xff]
      %v318 = vld [vmem:[%s290 + $0x70] sm:$0xff]
      %v319 = vld [vmem:[%s290 + $0x78] sm:$0xff]
      %v320 = vld [vmem:[%s290 + $0x80] sm:$0xff]
      %v321 = vld [vmem:[%s290 + $0x88] sm:$0xff]
      %v322 = vld [vmem:[%s290 + $0x90] sm:$0xff]
      %v323 = vld [vmem:[%s290 + $0x98] sm:$0xff]
      %v324 = vld [vmem:[%s290 + $0xa0] sm:$0xff]
      %v325 = vld [vmem:[%s290 + $0xa8] sm:$0xff]
      %v326 = vld [vmem:[%s290 + $0xb0] sm:$0xff]
      %v327 = vld [vmem:[%s290 + $0xb8] sm:$0xff]
      %v328 = vld [vmem:[%s290 + $0xc0] sm:$0xff]
      %v329 = vld [vmem:[%s290 + $0xc8] sm:$0xff]
      %v330 = vld [vmem:[%s290 + $0xd0] sm:$0xff]
      %v331 = vld [vmem:[%s290 + $0xd8] sm:$0xff]
      %v332 = vld [vmem:[%s290 + $0xe0] sm:$0xff]
      %v333 = vld [vmem:[%s290 + $0xe8] sm:$0xff]
      %v334 = vld [vmem:[%s290 + $0xf0] sm:$0xff]
      %v335 = vld [vmem:[%s290 + $0xf8] sm:$0xff]
      %v336 = vld [vmem:[%s290 + $0x100] sm:$0xff]
      %v337 = vld [vmem:[%s290 + $0x108] sm:$0xff]
      %v338 = vld [vmem:[%s290 + $0x110] sm:$0xff]
      %v339 = vld [vmem:[%s290 + $0x118] sm:$0xff]
      %v340 = vld [vmem:[%s290 + $0x120] sm:$0xff]
      %v341 = vld [vmem:[%s290 + $0x128] sm:$0xff]
      %v342 = vld [vmem:[%s290 + $0x130] sm:$0xff]
      %v343 = vld [vmem:[%s290 + $0x138] sm:$0xff]
      %v344 = vld [vmem:[%s290 + $0x140] sm:$0xff]
      %v345 = vld [vmem:[%s290 + $0x148] sm:$0xff]
      %v346 = vld [vmem:[%s290 + $0x150] sm:$0xff]
      %v347 = vld [vmem:[%s290 + $0x158] sm:$0xff]
      %v348 = vld [vmem:[%s290 + $0x160] sm:$0xff]
      %v349 = vld [vmem:[%s290 + $0x168] sm:$0xff]
      %v350 = vld [vmem:[%s290 + $0x170] sm:$0xff]
      %v351 = vld [vmem:[%s290 + $0x178] sm:$0xff]
      %v352 = vld [vmem:[%s290 + $0x180] sm:$0xff]
      %v353 = vld [vmem:[%s290 + $0x188] sm:$0xff]
      %v354 = vld [vmem:[%s290 + $0x190] sm:$0xff]
      %v355 = vld [vmem:[%s290 + $0x198] sm:$0xff]
      %v356 = vld [vmem:[%s290 + $0x1a0] sm:$0xff]
      %v357 = vld [vmem:[%s290 + $0x1a8] sm:$0xff]
      %v358 = vld [vmem:[%s290 + $0x1b0] sm:$0xff]
      %v359 = vld [vmem:[%s290 + $0x1b8] sm:$0xff]
      %v360 = vld [vmem:[%s290 + $0x1c0] sm:$0xff]
      %v361 = vld [vmem:[%s290 + $0x1c8] sm:$0xff]
      %v362 = vld [vmem:[%s290 + $0x1d0] sm:$0xff]
      %v363 = vld [vmem:[%s290 + $0x1d8] sm:$0xff]
      %v364 = vld [vmem:[%s290 + $0x1e0] sm:$0xff]
      %v365 = vld [vmem:[%s290 + $0x1e8] sm:$0xff]
      %v366 = vld [vmem:[%s290 + $0x1f0] sm:$0xff]
      %v367 = vld [vmem:[%s290 + $0x1f8] sm:$0xff]
      %v368 = vld [vmem:[%s296] sm:$0xff]
      %v369 = vld [vmem:[%s296 + $0x8] sm:$0xff]
      %v370 = vld [vmem:[%s296 + $0x10] sm:$0xff]
      %v371 = vld [vmem:[%s296 + $0x18] sm:$0xff]
      %v372 = vld [vmem:[%s296 + $0x20] sm:$0xff]
      %v373 = vld [vmem:[%s296 + $0x28] sm:$0xff]
      %v374 = vld [vmem:[%s296 + $0x30] sm:$0xff]
      %v375 = vld [vmem:[%s296 + $0x38] sm:$0xff]
      %v376 = vld [vmem:[%s296 + $0x40] sm:$0xff]
      %v377 = vld [vmem:[%s296 + $0x48] sm:$0xff]
      %v378 = vld [vmem:[%s296 + $0x50] sm:$0xff]
      %v379 = vld [vmem:[%s296 + $0x58] sm:$0xff]
      %v380 = vld [vmem:[%s296 + $0x60] sm:$0xff]
      %v381 = vld [vmem:[%s296 + $0x68] sm:$0xff]
      %v382 = vld [vmem:[%s296 + $0x70] sm:$0xff]
      %v383 = vld [vmem:[%s296 + $0x78] sm:$0xff]
      %v384 = vld [vmem:[%s296 + $0x80] sm:$0xff]
      %v385 = vld [vmem:[%s296 + $0x88] sm:$0xff]
      %v386 = vld [vmem:[%s296 + $0x90] sm:$0xff]
      %v387 = vld [vmem:[%s296 + $0x98] sm:$0xff]
      %v388 = vld [vmem:[%s296 + $0xa0] sm:$0xff]
      %v389 = vld [vmem:[%s296 + $0xa8] sm:$0xff]
      %v390 = vld [vmem:[%s296 + $0xb0] sm:$0xff]
      %v391 = vld [vmem:[%s296 + $0xb8] sm:$0xff]
      %v392 = vld [vmem:[%s296 + $0xc0] sm:$0xff]
      %v393 = vld [vmem:[%s296 + $0xc8] sm:$0xff]
      %v394 = vld [vmem:[%s296 + $0xd0] sm:$0xff]
      %v395 = vld [vmem:[%s296 + $0xd8] sm:$0xff]
      %v396 = vld [vmem:[%s296 + $0xe0] sm:$0xff]
      %v397 = vld [vmem:[%s296 + $0xe8] sm:$0xff]
      %v398 = vld [vmem:[%s296 + $0xf0] sm:$0xff]
      %v399 = vld [vmem:[%s296 + $0xf8] sm:$0xff]
      %v400 = vld [vmem:[%s296 + $0x100] sm:$0xff]
      %v401 = vld [vmem:[%s296 + $0x108] sm:$0xff]
      %v402 = vld [vmem:[%s296 + $0x110] sm:$0xff]
      %v403 = vld [vmem:[%s296 + $0x118] sm:$0xff]
      %v404 = vld [vmem:[%s296 + $0x120] sm:$0xff]
      %v405 = vld [vmem:[%s296 + $0x128] sm:$0xff]
      %v406 = vld [vmem:[%s296 + $0x130] sm:$0xff]
      %v407 = vld [vmem:[%s296 + $0x138] sm:$0xff]
      %v408 = vld [vmem:[%s296 + $0x140] sm:$0xff]
      %v409 = vld [vmem:[%s296 + $0x148] sm:$0xff]
      %v410 = vld [vmem:[%s296 + $0x150] sm:$0xff]
      %v411 = vld [vmem:[%s296 + $0x158] sm:$0xff]
      %v412 = vld [vmem:[%s296 + $0x160] sm:$0xff]
      %v413 = vld [vmem:[%s296 + $0x168] sm:$0xff]
      %v414 = vld [vmem:[%s296 + $0x170] sm:$0xff]
      %v415 = vld [vmem:[%s296 + $0x178] sm:$0xff]
      %v416 = vld [vmem:[%s296 + $0x180] sm:$0xff]
      %v417 = vld [vmem:[%s296 + $0x188] sm:$0xff]
      %v418 = vld [vmem:[%s296 + $0x190] sm:$0xff]
      %v419 = vld [vmem:[%s296 + $0x198] sm:$0xff]
      %v420 = vld [vmem:[%s296 + $0x1a0] sm:$0xff]
      %v421 = vld [vmem:[%s296 + $0x1a8] sm:$0xff]
      %v422 = vld [vmem:[%s296 + $0x1b0] sm:$0xff]
      %v423 = vld [vmem:[%s296 + $0x1b8] sm:$0xff]
      %v424 = vld [vmem:[%s296 + $0x1c0] sm:$0xff]
      %v425 = vld [vmem:[%s296 + $0x1c8] sm:$0xff]
      %v426 = vld [vmem:[%s296 + $0x1d0] sm:$0xff]
      %v427 = vld [vmem:[%s296 + $0x1d8] sm:$0xff]
      %v428 = vld [vmem:[%s296 + $0x1e0] sm:$0xff]
      %v429 = vld [vmem:[%s296 + $0x1e8] sm:$0xff]
      %v430 = vld [vmem:[%s296 + $0x1f0] sm:$0xff]
      %v431 = vld [vmem:[%s296 + $0x1f8] sm:$0xff]
      %v432 = vld [vmem:[%s2] sm:$0x7]
      %v433 = vld [vmem:[%s3] sm:$0x3]
      %vm434 = vcmask 15360
      %v436 = vsel %vm434, %v368, 0
      %v439 = vsel %vm434, %v369, 0
      %v442 = vsel %vm434, %v370, 0
      %v445 = vsel %vm434, %v371, 0
      %v448 = vsel %vm434, %v372, 0
      %v451 = vsel %vm434, %v373, 0
      %v454 = vsel %vm434, %v374, 0
      %v457 = vsel %vm434, %v375, 0
      %v460 = vsel %vm434, %v376, 0
      %v463 = vsel %vm434, %v377, 0
      %v466 = vsel %vm434, %v378, 0
      %v469 = vsel %vm434, %v379, 0
      %v472 = vsel %vm434, %v380, 0
      %v475 = vsel %vm434, %v381, 0
      %v478 = vsel %vm434, %v382, 0
      %v481 = vsel %vm434, %v383, 0
      %v484 = vsel %vm434, %v384, 0
      %v487 = vsel %vm434, %v385, 0
      %v490 = vsel %vm434, %v386, 0
      %v493 = vsel %vm434, %v387, 0
      %v496 = vsel %vm434, %v388, 0
      %v499 = vsel %vm434, %v389, 0
      %v502 = vsel %vm434, %v390, 0
      %v505 = vsel %vm434, %v391, 0
      %v508 = vsel %vm434, %v392, 0
      %v511 = vsel %vm434, %v393, 0
      %v514 = vsel %vm434, %v394, 0
      %v517 = vsel %vm434, %v395, 0
      %v520 = vsel %vm434, %v396, 0
      %v523 = vsel %vm434, %v397, 0
      %v526 = vsel %vm434, %v398, 0
      %v529 = vsel %vm434, %v399, 0
      %v532 = vsel %vm434, %v400, 0
      %v535 = vsel %vm434, %v401, 0
      %v538 = vsel %vm434, %v402, 0
      %v541 = vsel %vm434, %v403, 0
      %v544 = vsel %vm434, %v404, 0
      %v547 = vsel %vm434, %v405, 0
      %v550 = vsel %vm434, %v406, 0
      %v553 = vsel %vm434, %v407, 0
      %v556 = vsel %vm434, %v408, 0
      %v559 = vsel %vm434, %v409, 0
      %v562 = vsel %vm434, %v410, 0
      %v565 = vsel %vm434, %v411, 0
      %v568 = vsel %vm434, %v412, 0
      %v571 = vsel %vm434, %v413, 0
      %v574 = vsel %vm434, %v414, 0
      %v577 = vsel %vm434, %v415, 0
      %v580 = vsel %vm434, %v416, 0
      %v583 = vsel %vm434, %v417, 0
      %v586 = vsel %vm434, %v418, 0
      %v589 = vsel %vm434, %v419, 0
      %v592 = vsel %vm434, %v420, 0
      %v595 = vsel %vm434, %v421, 0
      %v598 = vsel %vm434, %v422, 0
      %v601 = vsel %vm434, %v423, 0
      %v604 = vsel %vm434, %v424, 0
      %v607 = vsel %vm434, %v425, 0
      %v610 = vsel %vm434, %v426, 0
      %v613 = vsel %vm434, %v427, 0
      %v616 = vsel %vm434, %v428, 0
      %v619 = vsel %vm434, %v429, 0
      %v622 = vsel %vm434, %v430, 0
      %v625 = vsel %vm434, %v431, 0
      %vm627 = vcmask 1041408
      %v629 = vsel %vm627, %v433, 0
      %631 = vmatprep.subr.mxu0 0.0
      %632 = vmatpush1.msra.mxu0 %v629
      %633 = vmatprep.subr.mxu0 0.0
      %634 = vmatpush1.msra.mxu0 0.0
      %635 = vmatprep.subr.mxu0 0.0
      %636 = vmatpush1.msra.mxu0 0.0
      %637 = vmatprep.subr.mxu0 0.0
      %638 = vmatpush1.msra.mxu0 0.0
      %639 = vmatprep.subr.mxu0 0.0
      %640 = vmatpush1.msra.mxu0 0.0
      %641 = vmatprep.subr.mxu0 0.0
      %642 = vmatpush1.msra.mxu0 0.0
      %643 = vmatprep.subr.mxu0 0.0
      %644 = vmatpush1.msra.mxu0 0.0
      %645 = vmatprep.subr.mxu0 0.0
      %646 = vmatpush1.msra.mxu0 0.0
      %647 = vmatprep.subr.mxu0 0.0
      %648 = vmatpush1.msra.mxu0 0.0
      %649 = vmatprep.subr.mxu0 0.0
      %650 = vmatpush1.msra.mxu0 0.0
      %651 = vmatprep.subr.mxu0 0.0
      %652 = vmatpush1.msra.mxu0 0.0
      %653 = vmatprep.subr.mxu0 0.0
      %654 = vmatpush1.msra.mxu0 0.0
      %655 = vmatprep.subr.mxu0 0.0
      %656 = vmatpush1.msra.mxu0 0.0
      %657 = vmatprep.subr.mxu0 0.0
      %658 = vmatpush1.msra.mxu0 0.0
      %659 = vmatprep.subr.mxu0 0.0
      %660 = vmatpush1.msra.mxu0 0.0
      %661 = vmatprep.subr.mxu0 0.0
      %662 = vmatpush1.msra.mxu0 0.0
      %663 = vmatprep.subr.mxu0 0.0
      %664 = vmatpush1.msra.mxu0 0.0
      %665 = vmatprep.subr.mxu0 0.0
      %666 = vmatpush1.msra.mxu0 0.0
      %667 = vmatprep.subr.mxu0 0.0
      %668 = vmatpush1.msra.mxu0 0.0
      %669 = vmatprep.subr.mxu0 0.0
      %670 = vmatpush1.msra.mxu0 0.0
      %671 = vmatprep.subr.mxu0 0.0
      %672 = vmatpush1.msra.mxu0 0.0
      %673 = vmatprep.subr.mxu0 0.0
      %674 = vmatpush1.msra.mxu0 0.0
      %675 = vmatprep.subr.mxu0 0.0
      %676 = vmatpush1.msra.mxu0 0.0
      %677 = vmatprep.subr.mxu0 0.0
      %678 = vmatpush1.msra.mxu0 0.0
      %679 = vmatprep.subr.mxu0 0.0
      %680 = vmatpush1.msra.mxu0 0.0
      %681 = vmatprep.subr.mxu0 0.0
      %682 = vmatpush1.msra.mxu0 0.0
      %683 = vmatprep.subr.mxu0 0.0
      %684 = vmatpush1.msra.mxu0 0.0
      %685 = vmatprep.subr.mxu0 0.0
      %686 = vmatpush1.msra.mxu0 0.0
      %687 = vmatprep.subr.mxu0 0.0
      %688 = vmatpush1.msra.mxu0 0.0
      %689 = vmatprep.subr.mxu0 0.0
      %690 = vmatpush1.msra.mxu0 0.0
      %691 = vmatprep.subr.mxu0 0.0
      %692 = vmatpush1.msra.mxu0 0.0
      %693 = vmatprep.subr.mxu0 0.0
      %694 = vmatpush1.msra.mxu0 0.0
      %695 = vmatprep.mubr.f32.mxu0 0.0
      %696 = vmatmul.mubr.f32.gmra.mrb[0].mxu0 %v436
      %v697 = vpop.f32.mrb[0].mxu0
      %v698 = vadd.f32 0.0, %v697
      %v699 = vpop.f32.mrb[0].mxu0
      %700 = vmatprep.mubr.f32.mxu0 0.0
      %701 = vmatmul.mubr.f32.gmra.mrb[0].mxu0 %v439
      %v702 = vpop.f32.mrb[0].mxu0
      %v703 = vadd.f32 0.0, %v702
      %v704 = vpop.f32.mrb[0].mxu0
      %705 = vmatprep.mubr.f32.mxu0 0.0
      %706 = vmatmul.mubr.f32.gmra.mrb[0].mxu0 %v442
      %v707 = vpop.f32.mrb[0].mxu0
      %v708 = vadd.f32 0.0, %v707
      %v709 = vpop.f32.mrb[0].mxu0
      %710 = vmatprep.mubr.f32.mxu0 0.0
      %711 = vmatmul.mubr.f32.gmra.mrb[0].mxu0 %v445
      %v712 = vpop.f32.mrb[0].mxu0
      %v713 = vadd.f32 0.0, %v712
      %v714 = vpop.f32.mrb[0].mxu0
      %715 = vmatprep.mubr.f32.mxu0 0.0
      %716 = vmatmul.mubr.f32.gmra.mrb[0].mxu0 %v448
      %v717 = vpop.f32.mrb[0].mxu0
      %v718 = vadd.f32 0.0, %v717
      %v719 = vpop.f32.mrb[0].mxu0
      %720 = vmatprep.mubr.f32.mxu0 0.0
      %721 = vmatmul.mubr.f32.gmra.mrb[0].mxu0 %v451
      %v722 = vpop.f32.mrb[0].mxu0
      %v723 = vadd.f32 0.0, %v722
      %v724 = vpop.f32.mrb[0].mxu0
      %725 = vmatprep.mubr.f32.mxu0 0.0
      %726 = vmatmul.mubr.f32.gmra.mrb[0].mxu0 %v454
      %v727 = vpop.f32.mrb[0].mxu0
      %v728 = vadd.f32 0.0, %v727
      %v729 = vpop.f32.mrb[0].mxu0
      %730 = vmatprep.mubr.f32.mxu0 0.0
      %731 = vmatmul.mubr.f32.gmra.mrb[0].mxu0 %v457
      %v732 = vpop.f32.mrb[0].mxu0
      %v733 = vadd.f32 0.0, %v732
      %v734 = vpop.f32.mrb[0].mxu0
      %735 = vmatprep.mubr.f32.mxu0 0.0
      %736 = vmatmul.mubr.f32.gmra.mrb[0].mxu0 %v460
      %v737 = vpop.f32.mrb[0].mxu0
      %v738 = vadd.f32 0.0, %v737
      %v739 = vpop.f32.mrb[0].mxu0
      %740 = vmatprep.mubr.f32.mxu0 0.0
      %741 = vmatmul.mubr.f32.gmra.mrb[0].mxu0 %v463
      %v742 = vpop.f32.mrb[0].mxu0
      %v743 = vadd.f32 0.0, %v742
      %v744 = vpop.f32.mrb[0].mxu0
      %745 = vmatprep.mubr.f32.mxu0 0.0
      %746 = vmatmul.mubr.f32.gmra.mrb[0].mxu0 %v466
      %v747 = vpop.f32.mrb[0].mxu0
      %v748 = vadd.f32 0.0, %v747
      %v749 = vpop.f32.mrb[0].mxu0
      %750 = vmatprep.mubr.f32.mxu0 0.0
      %751 = vmatmul.mubr.f32.gmra.mrb[0].mxu0 %v469
      %v752 = vpop.f32.mrb[0].mxu0
      %v753 = vadd.f32 0.0, %v752
      %v754 = vpop.f32.mrb[0].mxu0
      %755 = vmatprep.mubr.f32.mxu0 0.0
      %756 = vmatmul.mubr.f32.gmra.mrb[0].mxu0 %v472
      %v757 = vpop.f32.mrb[0].mxu0
      %v758 = vadd.f32 0.0, %v757
      %v759 = vpop.f32.mrb[0].mxu0
      %760 = vmatprep.mubr.f32.mxu0 0.0
      %761 = vmatmul.mubr.f32.gmra.mrb[0].mxu0 %v475
      %v762 = vpop.f32.mrb[0].mxu0
      %v763 = vadd.f32 0.0, %v762
      %v764 = vpop.f32.mrb[0].mxu0
      %765 = vmatprep.mubr.f32.mxu0 0.0
      %766 = vmatmul.mubr.f32.gmra.mrb[0].mxu0 %v478
      %v767 = vpop.f32.mrb[0].mxu0
      %v768 = vadd.f32 0.0, %v767
      %v769 = vpop.f32.mrb[0].mxu0
      %770 = vmatprep.mubr.f32.mxu0 0.0
      %771 = vmatmul.mubr.f32.gmra.mrb[0].mxu0 %v481
      %v772 = vpop.f32.mrb[0].mxu0
      %v773 = vadd.f32 0.0, %v772
      %v774 = vpop.f32.mrb[0].mxu0
      %775 = vmatprep.mubr.f32.mxu0 0.0
      %776 = vmatmul.mubr.f32.gmra.mrb[0].mxu0 %v484
      %v777 = vpop.f32.mrb[0].mxu0
      %v778 = vadd.f32 0.0, %v777
      %v779 = vpop.f32.mrb[0].mxu0
      %780 = vmatprep.mubr.f32.mxu0 0.0
      %781 = vmatmul.mubr.f32.gmra.mrb[0].mxu0 %v487
      %v782 = vpop.f32.mrb[0].mxu0
      %v783 = vadd.f32 0.0, %v782
      %v784 = vpop.f32.mrb[0].mxu0
      %785 = vmatprep.mubr.f32.mxu0 0.0
      %786 = vmatmul.mubr.f32.gmra.mrb[0].mxu0 %v490
      %v787 = vpop.f32.mrb[0].mxu0
      %v788 = vadd.f32 0.0, %v787
      %v789 = vpop.f32.mrb[0].mxu0
      %790 = vmatprep.mubr.f32.mxu0 0.0
      %791 = vmatmul.mubr.f32.gmra.mrb[0].mxu0 %v493
      %v792 = vpop.f32.mrb[0].mxu0
      %v793 = vadd.f32 0.0, %v792
      %v794 = vpop.f32.mrb[0].mxu0
      %795 = vmatprep.mubr.f32.mxu0 0.0
      %796 = vmatmul.mubr.f32.gmra.mrb[0].mxu0 %v496
      %v797 = vpop.f32.mrb[0].mxu0
      %v798 = vadd.f32 0.0, %v797
      %v799 = vpop.f32.mrb[0].mxu0
      %800 = vmatprep.mubr.f32.mxu0 0.0
      %801 = vmatmul.mubr.f32.gmra.mrb[0].mxu0 %v499
      %v802 = vpop.f32.mrb[0].mxu0
      %v803 = vadd.f32 0.0, %v802
      %v804 = vpop.f32.mrb[0].mxu0
      %805 = vmatprep.mubr.f32.mxu0 0.0
      %806 = vmatmul.mubr.f32.gmra.mrb[0].mxu0 %v502
      %v807 = vpop.f32.mrb[0].mxu0
      %v808 = vadd.f32 0.0, %v807
      %v809 = vpop.f32.mrb[0].mxu0
      %810 = vmatprep.mubr.f32.mxu0 0.0
      %811 = vmatmul.mubr.f32.gmra.mrb[0].mxu0 %v505
      %v812 = vpop.f32.mrb[0].mxu0
      %v813 = vadd.f32 0.0, %v812
      %v814 = vpop.f32.mrb[0].mxu0
      %815 = vmatprep.mubr.f32.mxu0 0.0
      %816 = vmatmul.mubr.f32.gmra.mrb[0].mxu0 %v508
      %v817 = vpop.f32.mrb[0].mxu0
      %v818 = vadd.f32 0.0, %v817
      %v819 = vpop.f32.mrb[0].mxu0
      %820 = vmatprep.mubr.f32.mxu0 0.0
      %821 = vmatmul.mubr.f32.gmra.mrb[0].mxu0 %v511
      %v822 = vpop.f32.mrb[0].mxu0
      %v823 = vadd.f32 0.0, %v822
      %v824 = vpop.f32.mrb[0].mxu0
      %825 = vmatprep.mubr.f32.mxu0 0.0
      %826 = vmatmul.mubr.f32.gmra.mrb[0].mxu0 %v514
      %v827 = vpop.f32.mrb[0].mxu0
      %v828 = vadd.f32 0.0, %v827
      %v829 = vpop.f32.mrb[0].mxu0
      %830 = vmatprep.mubr.f32.mxu0 0.0
      %831 = vmatmul.mubr.f32.gmra.mrb[0].mxu0 %v517
      %v832 = vpop.f32.mrb[0].mxu0
      %v833 = vadd.f32 0.0, %v832
      %v834 = vpop.f32.mrb[0].mxu0
      %835 = vmatprep.mubr.f32.mxu0 0.0
      %836 = vmatmul.mubr.f32.gmra.mrb[0].mxu0 %v520
      %v837 = vpop.f32.mrb[0].mxu0
      %v838 = vadd.f32 0.0, %v837
      %v839 = vpop.f32.mrb[0].mxu0
      %840 = vmatprep.mubr.f32.mxu0 0.0
      %841 = vmatmul.mubr.f32.gmra.mrb[0].mxu0 %v523
      %v842 = vpop.f32.mrb[0].mxu0
      %v843 = vadd.f32 0.0, %v842
      %v844 = vpop.f32.mrb[0].mxu0
      %845 = vmatprep.mubr.f32.mxu0 0.0
      %846 = vmatmul.mubr.f32.gmra.mrb[0].mxu0 %v526
      %v847 = vpop.f32.mrb[0].mxu0
      %v848 = vadd.f32 0.0, %v847
      %v849 = vpop.f32.mrb[0].mxu0
      %850 = vmatprep.mubr.f32.mxu0 0.0
      %851 = vmatmul.mubr.f32.gmra.mrb[0].mxu0 %v529
      %v852 = vpop.f32.mrb[0].mxu0
      %v853 = vadd.f32 0.0, %v852
      %v854 = vpop.f32.mrb[0].mxu0
      %855 = vmatprep.mubr.f32.mxu0 0.0
      %856 = vmatmul.mubr.f32.gmra.mrb[0].mxu0 %v532
      %v857 = vpop.f32.mrb[0].mxu0
      %v858 = vadd.f32 0.0, %v857
      %v859 = vpop.f32.mrb[0].mxu0
      %860 = vmatprep.mubr.f32.mxu0 0.0
      %861 = vmatmul.mubr.f32.gmra.mrb[0].mxu0 %v535
      %v862 = vpop.f32.mrb[0].mxu0
      %v863 = vadd.f32 0.0, %v862
      %v864 = vpop.f32.mrb[0].mxu0
      %865 = vmatprep.mubr.f32.mxu0 0.0
      %866 = vmatmul.mubr.f32.gmra.mrb[0].mxu0 %v538
      %v867 = vpop.f32.mrb[0].mxu0
      %v868 = vadd.f32 0.0, %v867
      %v869 = vpop.f32.mrb[0].mxu0
      %870 = vmatprep.mubr.f32.mxu0 0.0
      %871 = vmatmul.mubr.f32.gmra.mrb[0].mxu0 %v541
      %v872 = vpop.f32.mrb[0].mxu0
      %v873 = vadd.f32 0.0, %v872
      %v874 = vpop.f32.mrb[0].mxu0
      %875 = vmatprep.mubr.f32.mxu0 0.0
      %876 = vmatmul.mubr.f32.gmra.mrb[0].mxu0 %v544
      %v877 = vpop.f32.mrb[0].mxu0
      %v878 = vadd.f32 0.0, %v877
      %v879 = vpop.f32.mrb[0].mxu0
      %880 = vmatprep.mubr.f32.mxu0 0.0
      %881 = vmatmul.mubr.f32.gmra.mrb[0].mxu0 %v547
      %v882 = vpop.f32.mrb[0].mxu0
      %v883 = vadd.f32 0.0, %v882
      %v884 = vpop.f32.mrb[0].mxu0
      %885 = vmatprep.mubr.f32.mxu0 0.0
      %886 = vmatmul.mubr.f32.gmra.mrb[0].mxu0 %v550
      %v887 = vpop.f32.mrb[0].mxu0
      %v888 = vadd.f32 0.0, %v887
      %v889 = vpop.f32.mrb[0].mxu0
      %890 = vmatprep.mubr.f32.mxu0 0.0
      %891 = vmatmul.mubr.f32.gmra.mrb[0].mxu0 %v553
      %v892 = vpop.f32.mrb[0].mxu0
      %v893 = vadd.f32 0.0, %v892
      %v894 = vpop.f32.mrb[0].mxu0
      %895 = vmatprep.mubr.f32.mxu0 0.0
      %896 = vmatmul.mubr.f32.gmra.mrb[0].mxu0 %v556
      %v897 = vpop.f32.mrb[0].mxu0
      %v898 = vadd.f32 0.0, %v897
      %v899 = vpop.f32.mrb[0].mxu0
      %900 = vmatprep.mubr.f32.mxu0 0.0
      %901 = vmatmul.mubr.f32.gmra.mrb[0].mxu0 %v559
      %v902 = vpop.f32.mrb[0].mxu0
      %v903 = vadd.f32 0.0, %v902
      %v904 = vpop.f32.mrb[0].mxu0
      %905 = vmatprep.mubr.f32.mxu0 0.0
      %906 = vmatmul.mubr.f32.gmra.mrb[0].mxu0 %v562
      %v907 = vpop.f32.mrb[0].mxu0
      %v908 = vadd.f32 0.0, %v907
      %v909 = vpop.f32.mrb[0].mxu0
      %910 = vmatprep.mubr.f32.mxu0 0.0
      %911 = vmatmul.mubr.f32.gmra.mrb[0].mxu0 %v565
      %v912 = vpop.f32.mrb[0].mxu0
      %v913 = vadd.f32 0.0, %v912
      %v914 = vpop.f32.mrb[0].mxu0
      %915 = vmatprep.mubr.f32.mxu0 0.0
      %916 = vmatmul.mubr.f32.gmra.mrb[0].mxu0 %v568
      %v917 = vpop.f32.mrb[0].mxu0
      %v918 = vadd.f32 0.0, %v917
      %v919 = vpop.f32.mrb[0].mxu0
      %920 = vmatprep.mubr.f32.mxu0 0.0
      %921 = vmatmul.mubr.f32.gmra.mrb[0].mxu0 %v571
      %v922 = vpop.f32.mrb[0].mxu0
      %v923 = vadd.f32 0.0, %v922
      %v924 = vpop.f32.mrb[0].mxu0
      %925 = vmatprep.mubr.f32.mxu0 0.0
      %926 = vmatmul.mubr.f32.gmra.mrb[0].mxu0 %v574
      %v927 = vpop.f32.mrb[0].mxu0
      %v928 = vadd.f32 0.0, %v927
      %v929 = vpop.f32.mrb[0].mxu0
      %930 = vmatprep.mubr.f32.mxu0 0.0
      %931 = vmatmul.mubr.f32.gmra.mrb[0].mxu0 %v577
      %v932 = vpop.f32.mrb[0].mxu0
      %v933 = vadd.f32 0.0, %v932
      %v934 = vpop.f32.mrb[0].mxu0
      %935 = vmatprep.mubr.f32.mxu0 0.0
      %936 = vmatmul.mubr.f32.gmra.mrb[0].mxu0 %v580
      %v937 = vpop.f32.mrb[0].mxu0
      %v938 = vadd.f32 0.0, %v937
      %v939 = vpop.f32.mrb[0].mxu0
      %940 = vmatprep.mubr.f32.mxu0 0.0
      %941 = vmatmul.mubr.f32.gmra.mrb[0].mxu0 %v583
      %v942 = vpop.f32.mrb[0].mxu0
      %v943 = vadd.f32 0.0, %v942
      %v944 = vpop.f32.mrb[0].mxu0
      %945 = vmatprep.mubr.f32.mxu0 0.0
      %946 = vmatmul.mubr.f32.gmra.mrb[0].mxu0 %v586
      %v947 = vpop.f32.mrb[0].mxu0
      %v948 = vadd.f32 0.0, %v947
      %v949 = vpop.f32.mrb[0].mxu0
      %950 = vmatprep.mubr.f32.mxu0 0.0
      %951 = vmatmul.mubr.f32.gmra.mrb[0].mxu0 %v589
      %v952 = vpop.f32.mrb[0].mxu0
      %v953 = vadd.f32 0.0, %v952
      %v954 = vpop.f32.mrb[0].mxu0
      %955 = vmatprep.mubr.f32.mxu0 0.0
      %956 = vmatmul.mubr.f32.gmra.mrb[0].mxu0 %v592
      %v957 = vpop.f32.mrb[0].mxu0
      %v958 = vadd.f32 0.0, %v957
      %v959 = vpop.f32.mrb[0].mxu0
      %960 = vmatprep.mubr.f32.mxu0 0.0
      %961 = vmatmul.mubr.f32.gmra.mrb[0].mxu0 %v595
      %v962 = vpop.f32.mrb[0].mxu0
      %v963 = vadd.f32 0.0, %v962
      %v964 = vpop.f32.mrb[0].mxu0
      %965 = vmatprep.mubr.f32.mxu0 0.0
      %966 = vmatmul.mubr.f32.gmra.mrb[0].mxu0 %v598
      %v967 = vpop.f32.mrb[0].mxu0
      %v968 = vadd.f32 0.0, %v967
      %v969 = vpop.f32.mrb[0].mxu0
      %970 = vmatprep.mubr.f32.mxu0 0.0
      %971 = vmatmul.mubr.f32.gmra.mrb[0].mxu0 %v601
      %v972 = vpop.f32.mrb[0].mxu0
      %v973 = vadd.f32 0.0, %v972
      %v974 = vpop.f32.mrb[0].mxu0
      %975 = vmatprep.mubr.f32.mxu0 0.0
      %976 = vmatmul.mubr.f32.gmra.mrb[0].mxu0 %v604
      %v977 = vpop.f32.mrb[0].mxu0
      %v978 = vadd.f32 0.0, %v977
      %v979 = vpop.f32.mrb[0].mxu0
      %980 = vmatprep.mubr.f32.mxu0 0.0
      %981 = vmatmul.mubr.f32.gmra.mrb[0].mxu0 %v607
      %v982 = vpop.f32.mrb[0].mxu0
      %v983 = vadd.f32 0.0, %v982
      %v984 = vpop.f32.mrb[0].mxu0
      %985 = vmatprep.mubr.f32.mxu0 0.0
      %986 = vmatmul.mubr.f32.gmra.mrb[0].mxu0 %v610
      %v987 = vpop.f32.mrb[0].mxu0
      %v988 = vadd.f32 0.0, %v987
      %v989 = vpop.f32.mrb[0].mxu0
      %990 = vmatprep.mubr.f32.mxu0 0.0
      %991 = vmatmul.mubr.f32.gmra.mrb[0].mxu0 %v613
      %v992 = vpop.f32.mrb[0].mxu0
      %v993 = vadd.f32 0.0, %v992
      %v994 = vpop.f32.mrb[0].mxu0
      %995 = vmatprep.mubr.f32.mxu0 0.0
      %996 = vmatmul.mubr.f32.gmra.mrb[0].mxu0 %v616
      %v997 = vpop.f32.mrb[0].mxu0
      %v998 = vadd.f32 0.0, %v997
      %v999 = vpop.f32.mrb[0].mxu0
      %1000 = vmatprep.mubr.f32.mxu0 0.0
      %1001 = vmatmul.mubr.f32.gmra.mrb[0].mxu0 %v619
      %v1002 = vpop.f32.mrb[0].mxu0
      %v1003 = vadd.f32 0.0, %v1002
      %v1004 = vpop.f32.mrb[0].mxu0
      %1005 = vmatprep.mubr.f32.mxu0 0.0
      %1006 = vmatmul.mubr.f32.gmra.mrb[0].mxu0 %v622
      %v1007 = vpop.f32.mrb[0].mxu0
      %v1008 = vadd.f32 0.0, %v1007
      %v1009 = vpop.f32.mrb[0].mxu0
      %1010 = vmatprep.mubr.f32.mxu0 0.0
      %1011 = vmatmul.mubr.f32.gmra.mrb[0].mxu0 %v625
      %v1012 = vpop.f32.mrb[0].mxu0
      %v1013 = vadd.f32 0.0, %v1012
      %v1014 = vpop.f32.mrb[0].mxu0
      %1015 = vdwg.mxu0
      %vm1016 = vcmask 23552
      %v1018 = vsel %vm1016, %v304, 0
      %v1021 = vsel %vm1016, %v305, 0
      %v1024 = vsel %vm1016, %v306, 0
      %v1027 = vsel %vm1016, %v307, 0
      %v1030 = vsel %vm1016, %v308, 0
      %v1033 = vsel %vm1016, %v309, 0
      %v1036 = vsel %vm1016, %v310, 0
      %v1039 = vsel %vm1016, %v311, 0
      %v1042 = vsel %vm1016, %v312, 0
      %v1045 = vsel %vm1016, %v313, 0
      %v1048 = vsel %vm1016, %v314, 0
      %v1051 = vsel %vm1016, %v315, 0
      %v1054 = vsel %vm1016, %v316, 0
      %v1057 = vsel %vm1016, %v317, 0
      %v1060 = vsel %vm1016, %v318, 0
      %v1063 = vsel %vm1016, %v319, 0
      %v1066 = vsel %vm1016, %v320, 0
      %v1069 = vsel %vm1016, %v321, 0
      %v1072 = vsel %vm1016, %v322, 0
      %v1075 = vsel %vm1016, %v323, 0
      %v1078 = vsel %vm1016, %v324, 0
      %v1081 = vsel %vm1016, %v325, 0
      %v1084 = vsel %vm1016, %v326, 0
      %v1087 = vsel %vm1016, %v327, 0
      %v1090 = vsel %vm1016, %v328, 0
      %v1093 = vsel %vm1016, %v329, 0
      %v1096 = vsel %vm1016, %v330, 0
      %v1099 = vsel %vm1016, %v331, 0
      %v1102 = vsel %vm1016, %v332, 0
      %v1105 = vsel %vm1016, %v333, 0
      %v1108 = vsel %vm1016, %v334, 0
      %v1111 = vsel %vm1016, %v335, 0
      %v1114 = vsel %vm1016, %v336, 0
      %v1117 = vsel %vm1016, %v337, 0
      %v1120 = vsel %vm1016, %v338, 0
      %v1123 = vsel %vm1016, %v339, 0
      %v1126 = vsel %vm1016, %v340, 0
      %v1129 = vsel %vm1016, %v341, 0
      %v1132 = vsel %vm1016, %v342, 0
      %v1135 = vsel %vm1016, %v343, 0
      %v1138 = vsel %vm1016, %v344, 0
      %v1141 = vsel %vm1016, %v345, 0
      %v1144 = vsel %vm1016, %v346, 0
      %v1147 = vsel %vm1016, %v347, 0
      %v1150 = vsel %vm1016, %v348, 0
      %v1153 = vsel %vm1016, %v349, 0
      %v1156 = vsel %vm1016, %v350, 0
      %v1159 = vsel %vm1016, %v351, 0
      %v1162 = vsel %vm1016, %v352, 0
      %v1165 = vsel %vm1016, %v353, 0
      %v1168 = vsel %vm1016, %v354, 0
      %v1171 = vsel %vm1016, %v355, 0
      %v1174 = vsel %vm1016, %v356, 0
      %v1177 = vsel %vm1016, %v357, 0
      %v1180 = vsel %vm1016, %v358, 0
      %v1183 = vsel %vm1016, %v359, 0
      %v1186 = vsel %vm1016, %v360, 0
      %v1189 = vsel %vm1016, %v361, 0
      %v1192 = vsel %vm1016, %v362, 0
      %v1195 = vsel %vm1016, %v363, 0
      %v1198 = vsel %vm1016, %v364, 0
      %v1201 = vsel %vm1016, %v365, 0
      %v1204 = vsel %vm1016, %v366, 0
      %v1207 = vsel %vm1016, %v367, 0
      %vm1209 = vcmask 1042432
      %v1211 = vsel %vm1209, %v432, 0
      %1213 = vmatprep.subr.mxu0 0.0
      %1214 = vmatpush1.msra.mxu0 %v1211
      %1215 = vmatprep.subr.mxu0 0.0
      %1216 = vmatpush1.msra.mxu0 0.0
      %1217 = vmatprep.subr.mxu0 0.0
      %1218 = vmatpush1.msra.mxu0 0.0
      %1219 = vmatprep.subr.mxu0 0.0
      %1220 = vmatpush1.msra.mxu0 0.0
      %1221 = vmatprep.subr.mxu0 0.0
      %1222 = vmatpush1.msra.mxu0 0.0
      %1223 = vmatprep.subr.mxu0 0.0
      %1224 = vmatpush1.msra.mxu0 0.0
      %1225 = vmatprep.subr.mxu0 0.0
      %1226 = vmatpush1.msra.mxu0 0.0
      %1227 = vmatprep.subr.mxu0 0.0
      %1228 = vmatpush1.msra.mxu0 0.0
      %1229 = vmatprep.subr.mxu0 0.0
      %1230 = vmatpush1.msra.mxu0 0.0
      %1231 = vmatprep.subr.mxu0 0.0
      %1232 = vmatpush1.msra.mxu0 0.0
      %1233 = vmatprep.subr.mxu0 0.0
      %1234 = vmatpush1.msra.mxu0 0.0
      %1235 = vmatprep.subr.mxu0 0.0
      %1236 = vmatpush1.msra.mxu0 0.0
      %1237 = vmatprep.subr.mxu0 0.0
      %1238 = vmatpush1.msra.mxu0 0.0
      %1239 = vmatprep.subr.mxu0 0.0
      %1240 = vmatpush1.msra.mxu0 0.0
      %1241 = vmatprep.subr.mxu0 0.0
      %1242 = vmatpush1.msra.mxu0 0.0
      %1243 = vmatprep.subr.mxu0 0.0
      %1244 = vmatpush1.msra.mxu0 0.0
      %1245 = vmatprep.subr.mxu0 0.0
      %1246 = vmatpush1.msra.mxu0 0.0
      %1247 = vmatprep.subr.mxu0 0.0
      %1248 = vmatpush1.msra.mxu0 0.0
      %1249 = vmatprep.subr.mxu0 0.0
      %1250 = vmatpush1.msra.mxu0 0.0
      %1251 = vmatprep.subr.mxu0 0.0
      %1252 = vmatpush1.msra.mxu0 0.0
      %1253 = vmatprep.subr.mxu0 0.0
      %1254 = vmatpush1.msra.mxu0 0.0
      %1255 = vmatprep.subr.mxu0 0.0
      %1256 = vmatpush1.msra.mxu0 0.0
      %1257 = vmatprep.subr.mxu0 0.0
      %1258 = vmatpush1.msra.mxu0 0.0
      %1259 = vmatprep.subr.mxu0 0.0
      %1260 = vmatpush1.msra.mxu0 0.0
      %1261 = vmatprep.subr.mxu0 0.0
      %1262 = vmatpush1.msra.mxu0 0.0
      %1263 = vmatprep.subr.mxu0 0.0
      %1264 = vmatpush1.msra.mxu0 0.0
      %1265 = vmatprep.subr.mxu0 0.0
      %1266 = vmatpush1.msra.mxu0 0.0
      %1267 = vmatprep.subr.mxu0 0.0
      %1268 = vmatpush1.msra.mxu0 0.0
      %1269 = vmatprep.subr.mxu0 0.0
      %1270 = vmatpush1.msra.mxu0 0.0
      %1271 = vmatprep.subr.mxu0 0.0
      %1272 = vmatpush1.msra.mxu0 0.0
      %1273 = vmatprep.subr.mxu0 0.0
      %1274 = vmatpush1.msra.mxu0 0.0
      %1275 = vmatprep.subr.mxu0 0.0
      %1276 = vmatpush1.msra.mxu0 0.0
      %1277 = vmatprep.mubr.f32.mxu0 0.0
      %1278 = vmatmul.mubr.f32.gmra.mrb[0].mxu0 %v1018
      %v1279 = vpop.f32.mrb[0].mxu0
      %v1280 = vadd.f32 %v698, %v1279
      %v1281 = vpop.f32.mrb[0].mxu0
      %1282 = vmatprep.mubr.f32.mxu0 0.0
      %1283 = vmatmul.mubr.f32.gmra.mrb[0].mxu0 %v1021
      %v1284 = vpop.f32.mrb[0].mxu0
      %v1285 = vadd.f32 %v703, %v1284
      %v1286 = vpop.f32.mrb[0].mxu0
      %1287 = vmatprep.mubr.f32.mxu0 0.0
      %1288 = vmatmul.mubr.f32.gmra.mrb[0].mxu0 %v1024
      %v1289 = vpop.f32.mrb[0].mxu0
      %v1290 = vadd.f32 %v708, %v1289
      %v1291 = vpop.f32.mrb[0].mxu0
      %1292 = vmatprep.mubr.f32.mxu0 0.0
      %1293 = vmatmul.mubr.f32.gmra.mrb[0].mxu0 %v1027
      %v1294 = vpop.f32.mrb[0].mxu0
      %v1295 = vadd.f32 %v713, %v1294
      %v1296 = vpop.f32.mrb[0].mxu0
      %1297 = vmatprep.mubr.f32.mxu0 0.0
      %1298 = vmatmul.mubr.f32.gmra.mrb[0].mxu0 %v1030
      %v1299 = vpop.f32.mrb[0].mxu0
      %v1300 = vadd.f32 %v718, %v1299
      %v1301 = vpop.f32.mrb[0].mxu0
      %1302 = vmatprep.mubr.f32.mxu0 0.0
      %1303 = vmatmul.mubr.f32.gmra.mrb[0].mxu0 %v1033
      %v1304 = vpop.f32.mrb[0].mxu0
      %v1305 = vadd.f32 %v723, %v1304
      %v1306 = vpop.f32.mrb[0].mxu0
      %1307 = vmatprep.mubr.f32.mxu0 0.0
      %1308 = vmatmul.mubr.f32.gmra.mrb[0].mxu0 %v1036
      %v1309 = vpop.f32.mrb[0].mxu0
      %v1310 = vadd.f32 %v728, %v1309
      %v1311 = vpop.f32.mrb[0].mxu0
      %1312 = vmatprep.mubr.f32.mxu0 0.0
      %1313 = vmatmul.mubr.f32.gmra.mrb[0].mxu0 %v1039
      %v1314 = vpop.f32.mrb[0].mxu0
      %v1315 = vadd.f32 %v733, %v1314
      %v1316 = vpop.f32.mrb[0].mxu0
      %1317 = vmatprep.mubr.f32.mxu0 0.0
      %1318 = vmatmul.mubr.f32.gmra.mrb[0].mxu0 %v1042
      %v1319 = vpop.f32.mrb[0].mxu0
      %v1320 = vadd.f32 %v738, %v1319
      %v1321 = vpop.f32.mrb[0].mxu0
      %1322 = vmatprep.mubr.f32.mxu0 0.0
      %1323 = vmatmul.mubr.f32.gmra.mrb[0].mxu0 %v1045
      %v1324 = vpop.f32.mrb[0].mxu0
      %v1325 = vadd.f32 %v743, %v1324
      %v1326 = vpop.f32.mrb[0].mxu0
      %1327 = vmatprep.mubr.f32.mxu0 0.0
      %1328 = vmatmul.mubr.f32.gmra.mrb[0].mxu0 %v1048
      %v1329 = vpop.f32.mrb[0].mxu0
      %v1330 = vadd.f32 %v748, %v1329
      %v1331 = vpop.f32.mrb[0].mxu0
      %1332 = vmatprep.mubr.f32.mxu0 0.0
      %1333 = vmatmul.mubr.f32.gmra.mrb[0].mxu0 %v1051
      %v1334 = vpop.f32.mrb[0].mxu0
      %v1335 = vadd.f32 %v753, %v1334
      %v1336 = vpop.f32.mrb[0].mxu0
      %1337 = vmatprep.mubr.f32.mxu0 0.0
      %1338 = vmatmul.mubr.f32.gmra.mrb[0].mxu0 %v1054
      %v1339 = vpop.f32.mrb[0].mxu0
      %v1340 = vadd.f32 %v758, %v1339
      %v1341 = vpop.f32.mrb[0].mxu0
      %1342 = vmatprep.mubr.f32.mxu0 0.0
      %1343 = vmatmul.mubr.f32.gmra.mrb[0].mxu0 %v1057
      %v1344 = vpop.f32.mrb[0].mxu0
      %v1345 = vadd.f32 %v763, %v1344
      %v1346 = vpop.f32.mrb[0].mxu0
      %1347 = vmatprep.mubr.f32.mxu0 0.0
      %1348 = vmatmul.mubr.f32.gmra.mrb[0].mxu0 %v1060
      %v1349 = vpop.f32.mrb[0].mxu0
      %v1350 = vadd.f32 %v768, %v1349
      %v1351 = vpop.f32.mrb[0].mxu0
      %1352 = vmatprep.mubr.f32.mxu0 0.0
      %1353 = vmatmul.mubr.f32.gmra.mrb[0].mxu0 %v1063
      %v1354 = vpop.f32.mrb[0].mxu0
      %v1355 = vadd.f32 %v773, %v1354
      %v1356 = vpop.f32.mrb[0].mxu0
      %1357 = vmatprep.mubr.f32.mxu0 0.0
      %1358 = vmatmul.mubr.f32.gmra.mrb[0].mxu0 %v1066
      %v1359 = vpop.f32.mrb[0].mxu0
      %v1360 = vadd.f32 %v778, %v1359
      %v1361 = vpop.f32.mrb[0].mxu0
      %1362 = vmatprep.mubr.f32.mxu0 0.0
      %1363 = vmatmul.mubr.f32.gmra.mrb[0].mxu0 %v1069
      %v1364 = vpop.f32.mrb[0].mxu0
      %v1365 = vadd.f32 %v783, %v1364
      %v1366 = vpop.f32.mrb[0].mxu0
      %1367 = vmatprep.mubr.f32.mxu0 0.0
      %1368 = vmatmul.mubr.f32.gmra.mrb[0].mxu0 %v1072
      %v1369 = vpop.f32.mrb[0].mxu0
      %v1370 = vadd.f32 %v788, %v1369
      %v1371 = vpop.f32.mrb[0].mxu0
      %1372 = vmatprep.mubr.f32.mxu0 0.0
      %1373 = vmatmul.mubr.f32.gmra.mrb[0].mxu0 %v1075
      %v1374 = vpop.f32.mrb[0].mxu0
      %v1375 = vadd.f32 %v793, %v1374
      %v1376 = vpop.f32.mrb[0].mxu0
      %1377 = vmatprep.mubr.f32.mxu0 0.0
      %1378 = vmatmul.mubr.f32.gmra.mrb[0].mxu0 %v1078
      %v1379 = vpop.f32.mrb[0].mxu0
      %v1380 = vadd.f32 %v798, %v1379
      %v1381 = vpop.f32.mrb[0].mxu0
      %1382 = vmatprep.mubr.f32.mxu0 0.0
      %1383 = vmatmul.mubr.f32.gmra.mrb[0].mxu0 %v1081
      %v1384 = vpop.f32.mrb[0].mxu0
      %v1385 = vadd.f32 %v803, %v1384
      %v1386 = vpop.f32.mrb[0].mxu0
      %1387 = vmatprep.mubr.f32.mxu0 0.0
      %1388 = vmatmul.mubr.f32.gmra.mrb[0].mxu0 %v1084
      %v1389 = vpop.f32.mrb[0].mxu0
      %v1390 = vadd.f32 %v808, %v1389
      %v1391 = vpop.f32.mrb[0].mxu0
      %1392 = vmatprep.mubr.f32.mxu0 0.0
      %1393 = vmatmul.mubr.f32.gmra.mrb[0].mxu0 %v1087
      %v1394 = vpop.f32.mrb[0].mxu0
      %v1395 = vadd.f32 %v813, %v1394
      %v1396 = vpop.f32.mrb[0].mxu0
      %1397 = vmatprep.mubr.f32.mxu0 0.0
      %1398 = vmatmul.mubr.f32.gmra.mrb[0].mxu0 %v1090
      %v1399 = vpop.f32.mrb[0].mxu0
      %v1400 = vadd.f32 %v818, %v1399
      %v1401 = vpop.f32.mrb[0].mxu0
      %1402 = vmatprep.mubr.f32.mxu0 0.0
      %1403 = vmatmul.mubr.f32.gmra.mrb[0].mxu0 %v1093
      %v1404 = vpop.f32.mrb[0].mxu0
      %v1405 = vadd.f32 %v823, %v1404
      %v1406 = vpop.f32.mrb[0].mxu0
      %1407 = vmatprep.mubr.f32.mxu0 0.0
      %1408 = vmatmul.mubr.f32.gmra.mrb[0].mxu0 %v1096
      %v1409 = vpop.f32.mrb[0].mxu0
      %v1410 = vadd.f32 %v828, %v1409
      %v1411 = vpop.f32.mrb[0].mxu0
      %1412 = vmatprep.mubr.f32.mxu0 0.0
      %1413 = vmatmul.mubr.f32.gmra.mrb[0].mxu0 %v1099
      %v1414 = vpop.f32.mrb[0].mxu0
      %v1415 = vadd.f32 %v833, %v1414
      %v1416 = vpop.f32.mrb[0].mxu0
      %1417 = vmatprep.mubr.f32.mxu0 0.0
      %1418 = vmatmul.mubr.f32.gmra.mrb[0].mxu0 %v1102
      %v1419 = vpop.f32.mrb[0].mxu0
      %v1420 = vadd.f32 %v838, %v1419
      %v1421 = vpop.f32.mrb[0].mxu0
      %1422 = vmatprep.mubr.f32.mxu0 0.0
      %1423 = vmatmul.mubr.f32.gmra.mrb[0].mxu0 %v1105
      %v1424 = vpop.f32.mrb[0].mxu0
      %v1425 = vadd.f32 %v843, %v1424
      %v1426 = vpop.f32.mrb[0].mxu0
      %1427 = vmatprep.mubr.f32.mxu0 0.0
      %1428 = vmatmul.mubr.f32.gmra.mrb[0].mxu0 %v1108
      %v1429 = vpop.f32.mrb[0].mxu0
      %v1430 = vadd.f32 %v848, %v1429
      %v1431 = vpop.f32.mrb[0].mxu0
      %1432 = vmatprep.mubr.f32.mxu0 0.0
      %1433 = vmatmul.mubr.f32.gmra.mrb[0].mxu0 %v1111
      %v1434 = vpop.f32.mrb[0].mxu0
      %v1435 = vadd.f32 %v853, %v1434
      %v1436 = vpop.f32.mrb[0].mxu0
      %1437 = vmatprep.mubr.f32.mxu0 0.0
      %1438 = vmatmul.mubr.f32.gmra.mrb[0].mxu0 %v1114
      %v1439 = vpop.f32.mrb[0].mxu0
      %v1440 = vadd.f32 %v858, %v1439
      %v1441 = vpop.f32.mrb[0].mxu0
      %1442 = vmatprep.mubr.f32.mxu0 0.0
      %1443 = vmatmul.mubr.f32.gmra.mrb[0].mxu0 %v1117
      %v1444 = vpop.f32.mrb[0].mxu0
      %v1445 = vadd.f32 %v863, %v1444
      %v1446 = vpop.f32.mrb[0].mxu0
      %1447 = vmatprep.mubr.f32.mxu0 0.0
      %1448 = vmatmul.mubr.f32.gmra.mrb[0].mxu0 %v1120
      %v1449 = vpop.f32.mrb[0].mxu0
      %v1450 = vadd.f32 %v868, %v1449
      %v1451 = vpop.f32.mrb[0].mxu0
      %1452 = vmatprep.mubr.f32.mxu0 0.0
      %1453 = vmatmul.mubr.f32.gmra.mrb[0].mxu0 %v1123
      %v1454 = vpop.f32.mrb[0].mxu0
      %v1455 = vadd.f32 %v873, %v1454
      %v1456 = vpop.f32.mrb[0].mxu0
      %1457 = vmatprep.mubr.f32.mxu0 0.0
      %1458 = vmatmul.mubr.f32.gmra.mrb[0].mxu0 %v1126
      %v1459 = vpop.f32.mrb[0].mxu0
      %v1460 = vadd.f32 %v878, %v1459
      %v1461 = vpop.f32.mrb[0].mxu0
      %1462 = vmatprep.mubr.f32.mxu0 0.0
      %1463 = vmatmul.mubr.f32.gmra.mrb[0].mxu0 %v1129
      %v1464 = vpop.f32.mrb[0].mxu0
      %v1465 = vadd.f32 %v883, %v1464
      %v1466 = vpop.f32.mrb[0].mxu0
      %1467 = vmatprep.mubr.f32.mxu0 0.0
      %1468 = vmatmul.mubr.f32.gmra.mrb[0].mxu0 %v1132
      %v1469 = vpop.f32.mrb[0].mxu0
      %v1470 = vadd.f32 %v888, %v1469
      %v1471 = vpop.f32.mrb[0].mxu0
      %1472 = vmatprep.mubr.f32.mxu0 0.0
      %1473 = vmatmul.mubr.f32.gmra.mrb[0].mxu0 %v1135
      %v1474 = vpop.f32.mrb[0].mxu0
      %v1475 = vadd.f32 %v893, %v1474
      %v1476 = vpop.f32.mrb[0].mxu0
      %1477 = vmatprep.mubr.f32.mxu0 0.0
      %1478 = vmatmul.mubr.f32.gmra.mrb[0].mxu0 %v1138
      %v1479 = vpop.f32.mrb[0].mxu0
      %v1480 = vadd.f32 %v898, %v1479
      %v1481 = vpop.f32.mrb[0].mxu0
      %1482 = vmatprep.mubr.f32.mxu0 0.0
      %1483 = vmatmul.mubr.f32.gmra.mrb[0].mxu0 %v1141
      %v1484 = vpop.f32.mrb[0].mxu0
      %v1485 = vadd.f32 %v903, %v1484
      %v1486 = vpop.f32.mrb[0].mxu0
      %1487 = vmatprep.mubr.f32.mxu0 0.0
      %1488 = vmatmul.mubr.f32.gmra.mrb[0].mxu0 %v1144
      %v1489 = vpop.f32.mrb[0].mxu0
      %v1490 = vadd.f32 %v908, %v1489
      %v1491 = vpop.f32.mrb[0].mxu0
      %1492 = vmatprep.mubr.f32.mxu0 0.0
      %1493 = vmatmul.mubr.f32.gmra.mrb[0].mxu0 %v1147
      %v1494 = vpop.f32.mrb[0].mxu0
      %v1495 = vadd.f32 %v913, %v1494
      %v1496 = vpop.f32.mrb[0].mxu0
      %1497 = vmatprep.mubr.f32.mxu0 0.0
      %1498 = vmatmul.mubr.f32.gmra.mrb[0].mxu0 %v1150
      %v1499 = vpop.f32.mrb[0].mxu0
      %v1500 = vadd.f32 %v918, %v1499
      %v1501 = vpop.f32.mrb[0].mxu0
      %1502 = vmatprep.mubr.f32.mxu0 0.0
      %1503 = vmatmul.mubr.f32.gmra.mrb[0].mxu0 %v1153
      %v1504 = vpop.f32.mrb[0].mxu0
      %v1505 = vadd.f32 %v923, %v1504
      %v1506 = vpop.f32.mrb[0].mxu0
      %1507 = vmatprep.mubr.f32.mxu0 0.0
      %1508 = vmatmul.mubr.f32.gmra.mrb[0].mxu0 %v1156
      %v1509 = vpop.f32.mrb[0].mxu0
      %v1510 = vadd.f32 %v928, %v1509
      %v1511 = vpop.f32.mrb[0].mxu0
      %1512 = vmatprep.mubr.f32.mxu0 0.0
      %1513 = vmatmul.mubr.f32.gmra.mrb[0].mxu0 %v1159
      %v1514 = vpop.f32.mrb[0].mxu0
      %v1515 = vadd.f32 %v933, %v1514
      %v1516 = vpop.f32.mrb[0].mxu0
      %1517 = vmatprep.mubr.f32.mxu0 0.0
      %1518 = vmatmul.mubr.f32.gmra.mrb[0].mxu0 %v1162
      %v1519 = vpop.f32.mrb[0].mxu0
      %v1520 = vadd.f32 %v938, %v1519
      %v1521 = vpop.f32.mrb[0].mxu0
      %1522 = vmatprep.mubr.f32.mxu0 0.0
      %1523 = vmatmul.mubr.f32.gmra.mrb[0].mxu0 %v1165
      %v1524 = vpop.f32.mrb[0].mxu0
      %v1525 = vadd.f32 %v943, %v1524
      %v1526 = vpop.f32.mrb[0].mxu0
      %1527 = vmatprep.mubr.f32.mxu0 0.0
      %1528 = vmatmul.mubr.f32.gmra.mrb[0].mxu0 %v1168
      %v1529 = vpop.f32.mrb[0].mxu0
      %v1530 = vadd.f32 %v948, %v1529
      %v1531 = vpop.f32.mrb[0].mxu0
      %1532 = vmatprep.mubr.f32.mxu0 0.0
      %1533 = vmatmul.mubr.f32.gmra.mrb[0].mxu0 %v1171
      %v1534 = vpop.f32.mrb[0].mxu0
      %v1535 = vadd.f32 %v953, %v1534
      %v1536 = vpop.f32.mrb[0].mxu0
      %1537 = vmatprep.mubr.f32.mxu0 0.0
      %1538 = vmatmul.mubr.f32.gmra.mrb[0].mxu0 %v1174
      %v1539 = vpop.f32.mrb[0].mxu0
      %v1540 = vadd.f32 %v958, %v1539
      %v1541 = vpop.f32.mrb[0].mxu0
      %1542 = vmatprep.mubr.f32.mxu0 0.0
      %1543 = vmatmul.mubr.f32.gmra.mrb[0].mxu0 %v1177
      %v1544 = vpop.f32.mrb[0].mxu0
      %v1545 = vadd.f32 %v963, %v1544
      %v1546 = vpop.f32.mrb[0].mxu0
      %1547 = vmatprep.mubr.f32.mxu0 0.0
      %1548 = vmatmul.mubr.f32.gmra.mrb[0].mxu0 %v1180
      %v1549 = vpop.f32.mrb[0].mxu0
      %v1550 = vadd.f32 %v968, %v1549
      %v1551 = vpop.f32.mrb[0].mxu0
      %1552 = vmatprep.mubr.f32.mxu0 0.0
      %1553 = vmatmul.mubr.f32.gmra.mrb[0].mxu0 %v1183
      %v1554 = vpop.f32.mrb[0].mxu0
      %v1555 = vadd.f32 %v973, %v1554
      %v1556 = vpop.f32.mrb[0].mxu0
      %1557 = vmatprep.mubr.f32.mxu0 0.0
      %1558 = vmatmul.mubr.f32.gmra.mrb[0].mxu0 %v1186
      %v1559 = vpop.f32.mrb[0].mxu0
      %v1560 = vadd.f32 %v978, %v1559
      %v1561 = vpop.f32.mrb[0].mxu0
      %1562 = vmatprep.mubr.f32.mxu0 0.0
      %1563 = vmatmul.mubr.f32.gmra.mrb[0].mxu0 %v1189
      %v1564 = vpop.f32.mrb[0].mxu0
      %v1565 = vadd.f32 %v983, %v1564
      %v1566 = vpop.f32.mrb[0].mxu0
      %1567 = vmatprep.mubr.f32.mxu0 0.0
      %1568 = vmatmul.mubr.f32.gmra.mrb[0].mxu0 %v1192
      %v1569 = vpop.f32.mrb[0].mxu0
      %v1570 = vadd.f32 %v988, %v1569
      %v1571 = vpop.f32.mrb[0].mxu0
      %1572 = vmatprep.mubr.f32.mxu0 0.0
      %1573 = vmatmul.mubr.f32.gmra.mrb[0].mxu0 %v1195
      %v1574 = vpop.f32.mrb[0].mxu0
      %v1575 = vadd.f32 %v993, %v1574
      %v1576 = vpop.f32.mrb[0].mxu0
      %1577 = vmatprep.mubr.f32.mxu0 0.0
      %1578 = vmatmul.mubr.f32.gmra.mrb[0].mxu0 %v1198
      %v1579 = vpop.f32.mrb[0].mxu0
      %v1580 = vadd.f32 %v998, %v1579
      %v1581 = vpop.f32.mrb[0].mxu0
      %1582 = vmatprep.mubr.f32.mxu0 0.0
      %1583 = vmatmul.mubr.f32.gmra.mrb[0].mxu0 %v1201
      %v1584 = vpop.f32.mrb[0].mxu0
      %v1585 = vadd.f32 %v1003, %v1584
      %v1586 = vpop.f32.mrb[0].mxu0
      %1587 = vmatprep.mubr.f32.mxu0 0.0
      %1588 = vmatmul.mubr.f32.gmra.mrb[0].mxu0 %v1204
      %v1589 = vpop.f32.mrb[0].mxu0
      %v1590 = vadd.f32 %v1008, %v1589
      %v1591 = vpop.f32.mrb[0].mxu0
      %1592 = vmatprep.mubr.f32.mxu0 0.0
      %1593 = vmatmul.mubr.f32.gmra.mrb[0].mxu0 %v1207
      %v1594 = vpop.f32.mrb[0].mxu0
      %v1595 = vadd.f32 %v1013, %v1594
      %v1596 = vpop.f32.mrb[0].mxu0
      %1597 = vdwg.mxu0
      %v1598 = vld [vmem:[%s4] sm:$0x1]
      %v1600 = vlaneseq
      %v1601 = vshrl.u32 %v1600, 7
      %v1602 = vsub.s32 0, %v1601
      %v1603 = vrot.slane %v1598, %v1602
      %v1605 = vadd.f32 %v1280, %v1603
      %v1606 = vadd.f32 %v1285, %v1603
      %v1607 = vadd.f32 %v1290, %v1603
      %v1608 = vadd.f32 %v1295, %v1603
      %v1609 = vadd.f32 %v1300, %v1603
      %v1610 = vadd.f32 %v1305, %v1603
      %v1611 = vadd.f32 %v1310, %v1603
      %v1612 = vadd.f32 %v1315, %v1603
      %v1613 = vadd.f32 %v1320, %v1603
      %v1614 = vadd.f32 %v1325, %v1603
      %v1615 = vadd.f32 %v1330, %v1603
      %v1616 = vadd.f32 %v1335, %v1603
      %v1617 = vadd.f32 %v1340, %v1603
      %v1618 = vadd.f32 %v1345, %v1603
      %v1619 = vadd.f32 %v1350, %v1603
      %v1620 = vadd.f32 %v1355, %v1603
      %v1621 = vadd.f32 %v1360, %v1603
      %v1622 = vadd.f32 %v1365, %v1603
      %v1623 = vadd.f32 %v1370, %v1603
      %v1624 = vadd.f32 %v1375, %v1603
      %v1625 = vadd.f32 %v1380, %v1603
      %v1626 = vadd.f32 %v1385, %v1603
      %v1627 = vadd.f32 %v1390, %v1603
      %v1628 = vadd.f32 %v1395, %v1603
      %v1629 = vadd.f32 %v1400, %v1603
      %v1630 = vadd.f32 %v1405, %v1603
      %v1631 = vadd.f32 %v1410, %v1603
      %v1632 = vadd.f32 %v1415, %v1603
      %v1633 = vadd.f32 %v1420, %v1603
      %v1634 = vadd.f32 %v1425, %v1603
      %v1635 = vadd.f32 %v1430, %v1603
      %v1636 = vadd.f32 %v1435, %v1603
      %v1637 = vadd.f32 %v1440, %v1603
      %v1638 = vadd.f32 %v1445, %v1603
      %v1639 = vadd.f32 %v1450, %v1603
      %v1640 = vadd.f32 %v1455, %v1603
      %v1641 = vadd.f32 %v1460, %v1603
      %v1642 = vadd.f32 %v1465, %v1603
      %v1643 = vadd.f32 %v1470, %v1603
      %v1644 = vadd.f32 %v1475, %v1603
      %v1645 = vadd.f32 %v1480, %v1603
      %v1646 = vadd.f32 %v1485, %v1603
      %v1647 = vadd.f32 %v1490, %v1603
      %v1648 = vadd.f32 %v1495, %v1603
      %v1649 = vadd.f32 %v1500, %v1603
      %v1650 = vadd.f32 %v1505, %v1603
      %v1651 = vadd.f32 %v1510, %v1603
      %v1652 = vadd.f32 %v1515, %v1603
      %v1653 = vadd.f32 %v1520, %v1603
      %v1654 = vadd.f32 %v1525, %v1603
      %v1655 = vadd.f32 %v1530, %v1603
      %v1656 = vadd.f32 %v1535, %v1603
      %v1657 = vadd.f32 %v1540, %v1603
      %v1658 = vadd.f32 %v1545, %v1603
      %v1659 = vadd.f32 %v1550, %v1603
      %v1660 = vadd.f32 %v1555, %v1603
      %v1661 = vadd.f32 %v1560, %v1603
      %v1662 = vadd.f32 %v1565, %v1603
      %v1663 = vadd.f32 %v1570, %v1603
      %v1664 = vadd.f32 %v1575, %v1603
      %v1665 = vadd.f32 %v1580, %v1603
      %v1666 = vadd.f32 %v1585, %v1603
      %v1667 = vadd.f32 %v1590, %v1603
      %v1668 = vadd.f32 %v1595, %v1603
      %v1669 = vmax.f32 %v1605, 0.0
      %v1670 = vmax.f32 %v1606, 0.0
      %v1671 = vmax.f32 %v1607, 0.0
      %v1672 = vmax.f32 %v1608, 0.0
      %v1673 = vmax.f32 %v1609, 0.0
      %v1674 = vmax.f32 %v1610, 0.0
      %v1675 = vmax.f32 %v1611, 0.0
      %v1676 = vmax.f32 %v1612, 0.0
      %v1677 = vmax.f32 %v1613, 0.0
      %v1678 = vmax.f32 %v1614, 0.0
      %v1679 = vmax.f32 %v1615, 0.0
      %v1680 = vmax.f32 %v1616, 0.0
      %v1681 = vmax.f32 %v1617, 0.0
      %v1682 = vmax.f32 %v1618, 0.0
      %v1683 = vmax.f32 %v1619, 0.0
      %v1684 = vmax.f32 %v1620, 0.0
      %v1685 = vmax.f32 %v1621, 0.0
      %v1686 = vmax.f32 %v1622, 0.0
      %v1687 = vmax.f32 %v1623, 0.0
      %v1688 = vmax.f32 %v1624, 0.0
      %v1689 = vmax.f32 %v1625, 0.0
      %v1690 = vmax.f32 %v1626, 0.0
      %v1691 = vmax.f32 %v1627, 0.0
      %v1692 = vmax.f32 %v1628, 0.0
      %v1693 = vmax.f32 %v1629, 0.0
      %v1694 = vmax.f32 %v1630, 0.0
      %v1695 = vmax.f32 %v1631, 0.0
      %v1696 = vmax.f32 %v1632, 0.0
      %v1697 = vmax.f32 %v1633, 0.0
      %v1698 = vmax.f32 %v1634, 0.0
      %v1699 = vmax.f32 %v1635, 0.0
      %v1700 = vmax.f32 %v1636, 0.0
      %v1701 = vmax.f32 %v1637, 0.0
      %v1702 = vmax.f32 %v1638, 0.0
      %v1703 = vmax.f32 %v1639, 0.0
      %v1704 = vmax.f32 %v1640, 0.0
      %v1705 = vmax.f32 %v1641, 0.0
      %v1706 = vmax.f32 %v1642, 0.0
      %v1707 = vmax.f32 %v1643, 0.0
      %v1708 = vmax.f32 %v1644, 0.0
      %v1709 = vmax.f32 %v1645, 0.0
      %v1710 = vmax.f32 %v1646, 0.0
      %v1711 = vmax.f32 %v1647, 0.0
      %v1712 = vmax.f32 %v1648, 0.0
      %v1713 = vmax.f32 %v1649, 0.0
      %v1714 = vmax.f32 %v1650, 0.0
      %v1715 = vmax.f32 %v1651, 0.0
      %v1716 = vmax.f32 %v1652, 0.0
      %v1717 = vmax.f32 %v1653, 0.0
      %v1718 = vmax.f32 %v1654, 0.0
      %v1719 = vmax.f32 %v1655, 0.0
      %v1720 = vmax.f32 %v1656, 0.0
      %v1721 = vmax.f32 %v1657, 0.0
      %v1722 = vmax.f32 %v1658, 0.0
      %v1723 = vmax.f32 %v1659, 0.0
      %v1724 = vmax.f32 %v1660, 0.0
      %v1725 = vmax.f32 %v1661, 0.0
      %v1726 = vmax.f32 %v1662, 0.0
      %v1727 = vmax.f32 %v1663, 0.0
      %v1728 = vmax.f32 %v1664, 0.0
      %v1729 = vmax.f32 %v1665, 0.0
      %v1730 = vmax.f32 %v1666, 0.0
      %v1731 = vmax.f32 %v1667, 0.0
      %v1732 = vmax.f32 %v1668, 0.0
      %v1733 = vld [vmem:[%s5] sm:$0xff]
      %v1734 = vld [vmem:[%s5 + $0x8] sm:$0xff]
      %v1735 = vld [vmem:[%s5 + $0x10] sm:$0xff]
      %v1736 = vld [vmem:[%s5 + $0x18] sm:$0xff]
      %v1737 = vld [vmem:[%s5 + $0x20] sm:$0xff]
      %v1738 = vld [vmem:[%s5 + $0x28] sm:$0xff]
      %v1739 = vld [vmem:[%s5 + $0x30] sm:$0xff]
      %v1740 = vld [vmem:[%s5 + $0x38] sm:$0xff]
      %v1741 = vld [vmem:[%s5 + $0x40] sm:$0xff]
      %v1742 = vld [vmem:[%s5 + $0x48] sm:$0xff]
      %v1743 = vld [vmem:[%s5 + $0x50] sm:$0xff]
      %v1744 = vld [vmem:[%s5 + $0x58] sm:$0xff]
      %v1745 = vld [vmem:[%s5 + $0x60] sm:$0xff]
      %v1746 = vld [vmem:[%s5 + $0x68] sm:$0xff]
      %v1747 = vld [vmem:[%s5 + $0x70] sm:$0xff]
      %v1748 = vld [vmem:[%s5 + $0x78] sm:$0xff]
      %1749 = vmatprep.subr.mxu0 0.0
      %1750 = vmatpush1.msra.mxu0 %v1733
      %1751 = vmatprep.subr.mxu0 0.0
      %1752 = vmatpush1.msra.mxu0 %v1734
      %1753 = vmatprep.subr.mxu0 0.0
      %1754 = vmatpush1.msra.mxu0 %v1735
      %1755 = vmatprep.subr.mxu0 0.0
      %1756 = vmatpush1.msra.mxu0 %v1736
      %1757 = vmatprep.subr.mxu0 0.0
      %1758 = vmatpush1.msra.mxu0 %v1737
      %1759 = vmatprep.subr.mxu0 0.0
      %1760 = vmatpush1.msra.mxu0 %v1738
      %1761 = vmatprep.subr.mxu0 0.0
      %1762 = vmatpush1.msra.mxu0 %v1739
      %1763 = vmatprep.subr.mxu0 0.0
      %1764 = vmatpush1.msra.mxu0 %v1740
      %1765 = vmatprep.subr.mxu0 0.0
      %1766 = vmatpush1.msra.mxu0 %v1741
      %1767 = vmatprep.subr.mxu0 0.0
      %1768 = vmatpush1.msra.mxu0 %v1742
      %1769 = vmatprep.subr.mxu0 0.0
      %1770 = vmatpush1.msra.mxu0 %v1743
      %1771 = vmatprep.subr.mxu0 0.0
      %1772 = vmatpush1.msra.mxu0 %v1744
      %1773 = vmatprep.subr.mxu0 0.0
      %1774 = vmatpush1.msra.mxu0 %v1745
      %1775 = vmatprep.subr.mxu0 0.0
      %1776 = vmatpush1.msra.mxu0 %v1746
      %1777 = vmatprep.subr.mxu0 0.0
      %1778 = vmatpush1.msra.mxu0 %v1747
      %1779 = vmatprep.subr.mxu0 0.0
      %1780 = vmatpush1.msra.mxu0 %v1748
      %1781 = vmatprep.subr.mxu0 0.0
      %1782 = vmatpush1.msra.mxu0 0.0
      %1783 = vmatprep.subr.mxu0 0.0
      %1784 = vmatpush1.msra.mxu0 0.0
      %1785 = vmatprep.subr.mxu0 0.0
      %1786 = vmatpush1.msra.mxu0 0.0
      %1787 = vmatprep.subr.mxu0 0.0
      %1788 = vmatpush1.msra.mxu0 0.0
      %1789 = vmatprep.subr.mxu0 0.0
      %1790 = vmatpush1.msra.mxu0 0.0
      %1791 = vmatprep.subr.mxu0 0.0
      %1792 = vmatpush1.msra.mxu0 0.0
      %1793 = vmatprep.subr.mxu0 0.0
      %1794 = vmatpush1.msra.mxu0 0.0
      %1795 = vmatprep.subr.mxu0 0.0
      %1796 = vmatpush1.msra.mxu0 0.0
      %1797 = vmatprep.subr.mxu0 0.0
      %1798 = vmatpush1.msra.mxu0 0.0
      %1799 = vmatprep.subr.mxu0 0.0
      %1800 = vmatpush1.msra.mxu0 0.0
      %1801 = vmatprep.subr.mxu0 0.0
      %1802 = vmatpush1.msra.mxu0 0.0
      %1803 = vmatprep.subr.mxu0 0.0
      %1804 = vmatpush1.msra.mxu0 0.0
      %1805 = vmatprep.subr.mxu0 0.0
      %1806 = vmatpush1.msra.mxu0 0.0
      %1807 = vmatprep.subr.mxu0 0.0
      %1808 = vmatpush1.msra.mxu0 0.0
      %1809 = vmatprep.subr.mxu0 0.0
      %1810 = vmatpush1.msra.mxu0 0.0
      %1811 = vmatprep.subr.mxu0 0.0
      %1812 = vmatpush1.msra.mxu0 0.0
      %1813 = vmatprep.mubr.f32.mxu0 0.0
      %1814 = vmatmul.mubr.f32.gmra.mrb[0].mxu0 %v1669
      %v1815 = vpop.f32.mrb[0].mxu0
      %v1816 = vadd.f32 %v304, %v1815
      %v1817 = vpop.f32.mrb[0].mxu0
      %1818 = vmatprep.mubr.f32.mxu0 0.0
      %1819 = vmatmul.mubr.f32.gmra.mrb[0].mxu0 %v1670
      %v1820 = vpop.f32.mrb[0].mxu0
      %v1821 = vadd.f32 %v305, %v1820
      %v1822 = vpop.f32.mrb[0].mxu0
      %1823 = vmatprep.mubr.f32.mxu0 0.0
      %1824 = vmatmul.mubr.f32.gmra.mrb[0].mxu0 %v1671
      %v1825 = vpop.f32.mrb[0].mxu0
      %v1826 = vadd.f32 %v306, %v1825
      %v1827 = vpop.f32.mrb[0].mxu0
      %1828 = vmatprep.mubr.f32.mxu0 0.0
      %1829 = vmatmul.mubr.f32.gmra.mrb[0].mxu0 %v1672
      %v1830 = vpop.f32.mrb[0].mxu0
      %v1831 = vadd.f32 %v307, %v1830
      %v1832 = vpop.f32.mrb[0].mxu0
      %1833 = vmatprep.mubr.f32.mxu0 0.0
      %1834 = vmatmul.mubr.f32.gmra.mrb[0].mxu0 %v1673
      %v1835 = vpop.f32.mrb[0].mxu0
      %v1836 = vadd.f32 %v308, %v1835
      %v1837 = vpop.f32.mrb[0].mxu0
      %1838 = vmatprep.mubr.f32.mxu0 0.0
      %1839 = vmatmul.mubr.f32.gmra.mrb[0].mxu0 %v1674
      %v1840 = vpop.f32.mrb[0].mxu0
      %v1841 = vadd.f32 %v309, %v1840
      %v1842 = vpop.f32.mrb[0].mxu0
      %1843 = vmatprep.mubr.f32.mxu0 0.0
      %1844 = vmatmul.mubr.f32.gmra.mrb[0].mxu0 %v1675
      %v1845 = vpop.f32.mrb[0].mxu0
      %v1846 = vadd.f32 %v310, %v1845
      %v1847 = vpop.f32.mrb[0].mxu0
      %1848 = vmatprep.mubr.f32.mxu0 0.0
      %1849 = vmatmul.mubr.f32.gmra.mrb[0].mxu0 %v1676
      %v1850 = vpop.f32.mrb[0].mxu0
      %v1851 = vadd.f32 %v311, %v1850
      %v1852 = vpop.f32.mrb[0].mxu0
      %1853 = vmatprep.mubr.f32.mxu0 0.0
      %1854 = vmatmul.mubr.f32.gmra.mrb[0].mxu0 %v1677
      %v1855 = vpop.f32.mrb[0].mxu0
      %v1856 = vadd.f32 %v312, %v1855
      %v1857 = vpop.f32.mrb[0].mxu0
      %1858 = vmatprep.mubr.f32.mxu0 0.0
      %1859 = vmatmul.mubr.f32.gmra.mrb[0].mxu0 %v1678
      %v1860 = vpop.f32.mrb[0].mxu0
      %v1861 = vadd.f32 %v313, %v1860
      %v1862 = vpop.f32.mrb[0].mxu0
      %1863 = vmatprep.mubr.f32.mxu0 0.0
      %1864 = vmatmul.mubr.f32.gmra.mrb[0].mxu0 %v1679
      %v1865 = vpop.f32.mrb[0].mxu0
      %v1866 = vadd.f32 %v314, %v1865
      %v1867 = vpop.f32.mrb[0].mxu0
      %1868 = vmatprep.mubr.f32.mxu0 0.0
      %1869 = vmatmul.mubr.f32.gmra.mrb[0].mxu0 %v1680
      %v1870 = vpop.f32.mrb[0].mxu0
      %v1871 = vadd.f32 %v315, %v1870
      %v1872 = vpop.f32.mrb[0].mxu0
      %1873 = vmatprep.mubr.f32.mxu0 0.0
      %1874 = vmatmul.mubr.f32.gmra.mrb[0].mxu0 %v1681
      %v1875 = vpop.f32.mrb[0].mxu0
      %v1876 = vadd.f32 %v316, %v1875
      %v1877 = vpop.f32.mrb[0].mxu0
      %1878 = vmatprep.mubr.f32.mxu0 0.0
      %1879 = vmatmul.mubr.f32.gmra.mrb[0].mxu0 %v1682
      %v1880 = vpop.f32.mrb[0].mxu0
      %v1881 = vadd.f32 %v317, %v1880
      %v1882 = vpop.f32.mrb[0].mxu0
      %1883 = vmatprep.mubr.f32.mxu0 0.0
      %1884 = vmatmul.mubr.f32.gmra.mrb[0].mxu0 %v1683
      %v1885 = vpop.f32.mrb[0].mxu0
      %v1886 = vadd.f32 %v318, %v1885
      %v1887 = vpop.f32.mrb[0].mxu0
      %1888 = vmatprep.mubr.f32.mxu0 0.0
      %1889 = vmatmul.mubr.f32.gmra.mrb[0].mxu0 %v1684
      %v1890 = vpop.f32.mrb[0].mxu0
      %v1891 = vadd.f32 %v319, %v1890
      %v1892 = vpop.f32.mrb[0].mxu0
      %1893 = vmatprep.mubr.f32.mxu0 0.0
      %1894 = vmatmul.mubr.f32.gmra.mrb[0].mxu0 %v1685
      %v1895 = vpop.f32.mrb[0].mxu0
      %v1896 = vadd.f32 %v320, %v1895
      %v1897 = vpop.f32.mrb[0].mxu0
      %1898 = vmatprep.mubr.f32.mxu0 0.0
      %1899 = vmatmul.mubr.f32.gmra.mrb[0].mxu0 %v1686
      %v1900 = vpop.f32.mrb[0].mxu0
      %v1901 = vadd.f32 %v321, %v1900
      %v1902 = vpop.f32.mrb[0].mxu0
      %1903 = vmatprep.mubr.f32.mxu0 0.0
      %1904 = vmatmul.mubr.f32.gmra.mrb[0].mxu0 %v1687
      %v1905 = vpop.f32.mrb[0].mxu0
      %v1906 = vadd.f32 %v322, %v1905
      %v1907 = vpop.f32.mrb[0].mxu0
      %1908 = vmatprep.mubr.f32.mxu0 0.0
      %1909 = vmatmul.mubr.f32.gmra.mrb[0].mxu0 %v1688
      %v1910 = vpop.f32.mrb[0].mxu0
      %v1911 = vadd.f32 %v323, %v1910
      %v1912 = vpop.f32.mrb[0].mxu0
      %1913 = vmatprep.mubr.f32.mxu0 0.0
      %1914 = vmatmul.mubr.f32.gmra.mrb[0].mxu0 %v1689
      %v1915 = vpop.f32.mrb[0].mxu0
      %v1916 = vadd.f32 %v324, %v1915
      %v1917 = vpop.f32.mrb[0].mxu0
      %1918 = vmatprep.mubr.f32.mxu0 0.0
      %1919 = vmatmul.mubr.f32.gmra.mrb[0].mxu0 %v1690
      %v1920 = vpop.f32.mrb[0].mxu0
      %v1921 = vadd.f32 %v325, %v1920
      %v1922 = vpop.f32.mrb[0].mxu0
      %1923 = vmatprep.mubr.f32.mxu0 0.0
      %1924 = vmatmul.mubr.f32.gmra.mrb[0].mxu0 %v1691
      %v1925 = vpop.f32.mrb[0].mxu0
      %v1926 = vadd.f32 %v326, %v1925
      %v1927 = vpop.f32.mrb[0].mxu0
      %1928 = vmatprep.mubr.f32.mxu0 0.0
      %1929 = vmatmul.mubr.f32.gmra.mrb[0].mxu0 %v1692
      %v1930 = vpop.f32.mrb[0].mxu0
      %v1931 = vadd.f32 %v327, %v1930
      %v1932 = vpop.f32.mrb[0].mxu0
      %1933 = vmatprep.mubr.f32.mxu0 0.0
      %1934 = vmatmul.mubr.f32.gmra.mrb[0].mxu0 %v1693
      %v1935 = vpop.f32.mrb[0].mxu0
      %v1936 = vadd.f32 %v328, %v1935
      %v1937 = vpop.f32.mrb[0].mxu0
      %1938 = vmatprep.mubr.f32.mxu0 0.0
      %1939 = vmatmul.mubr.f32.gmra.mrb[0].mxu0 %v1694
      %v1940 = vpop.f32.mrb[0].mxu0
      %v1941 = vadd.f32 %v329, %v1940
      %v1942 = vpop.f32.mrb[0].mxu0
      %1943 = vmatprep.mubr.f32.mxu0 0.0
      %1944 = vmatmul.mubr.f32.gmra.mrb[0].mxu0 %v1695
      %v1945 = vpop.f32.mrb[0].mxu0
      %v1946 = vadd.f32 %v330, %v1945
      %v1947 = vpop.f32.mrb[0].mxu0
      %1948 = vmatprep.mubr.f32.mxu0 0.0
      %1949 = vmatmul.mubr.f32.gmra.mrb[0].mxu0 %v1696
      %v1950 = vpop.f32.mrb[0].mxu0
      %v1951 = vadd.f32 %v331, %v1950
      %v1952 = vpop.f32.mrb[0].mxu0
      %1953 = vmatprep.mubr.f32.mxu0 0.0
      %1954 = vmatmul.mubr.f32.gmra.mrb[0].mxu0 %v1697
      %v1955 = vpop.f32.mrb[0].mxu0
      %v1956 = vadd.f32 %v332, %v1955
      %v1957 = vpop.f32.mrb[0].mxu0
      %1958 = vmatprep.mubr.f32.mxu0 0.0
      %1959 = vmatmul.mubr.f32.gmra.mrb[0].mxu0 %v1698
      %v1960 = vpop.f32.mrb[0].mxu0
      %v1961 = vadd.f32 %v333, %v1960
      %v1962 = vpop.f32.mrb[0].mxu0
      %1963 = vmatprep.mubr.f32.mxu0 0.0
      %1964 = vmatmul.mubr.f32.gmra.mrb[0].mxu0 %v1699
      %v1965 = vpop.f32.mrb[0].mxu0
      %v1966 = vadd.f32 %v334, %v1965
      %v1967 = vpop.f32.mrb[0].mxu0
      %1968 = vmatprep.mubr.f32.mxu0 0.0
      %1969 = vmatmul.mubr.f32.gmra.mrb[0].mxu0 %v1700
      %v1970 = vpop.f32.mrb[0].mxu0
      %v1971 = vadd.f32 %v335, %v1970
      %v1972 = vpop.f32.mrb[0].mxu0
      %1973 = vmatprep.mubr.f32.mxu0 0.0
      %1974 = vmatmul.mubr.f32.gmra.mrb[0].mxu0 %v1701
      %v1975 = vpop.f32.mrb[0].mxu0
      %v1976 = vadd.f32 %v336, %v1975
      %v1977 = vpop.f32.mrb[0].mxu0
      %1978 = vmatprep.mubr.f32.mxu0 0.0
      %1979 = vmatmul.mubr.f32.gmra.mrb[0].mxu0 %v1702
      %v1980 = vpop.f32.mrb[0].mxu0
      %v1981 = vadd.f32 %v337, %v1980
      %v1982 = vpop.f32.mrb[0].mxu0
      %1983 = vmatprep.mubr.f32.mxu0 0.0
      %1984 = vmatmul.mubr.f32.gmra.mrb[0].mxu0 %v1703
      %v1985 = vpop.f32.mrb[0].mxu0
      %v1986 = vadd.f32 %v338, %v1985
      %v1987 = vpop.f32.mrb[0].mxu0
      %1988 = vmatprep.mubr.f32.mxu0 0.0
      %1989 = vmatmul.mubr.f32.gmra.mrb[0].mxu0 %v1704
      %v1990 = vpop.f32.mrb[0].mxu0
      %v1991 = vadd.f32 %v339, %v1990
      %v1992 = vpop.f32.mrb[0].mxu0
      %1993 = vmatprep.mubr.f32.mxu0 0.0
      %1994 = vmatmul.mubr.f32.gmra.mrb[0].mxu0 %v1705
      %v1995 = vpop.f32.mrb[0].mxu0
      %v1996 = vadd.f32 %v340, %v1995
      %v1997 = vpop.f32.mrb[0].mxu0
      %1998 = vmatprep.mubr.f32.mxu0 0.0
      %1999 = vmatmul.mubr.f32.gmra.mrb[0].mxu0 %v1706
      %v2000 = vpop.f32.mrb[0].mxu0
      %v2001 = vadd.f32 %v341, %v2000
      %v2002 = vpop.f32.mrb[0].mxu0
      %2003 = vmatprep.mubr.f32.mxu0 0.0
      %2004 = vmatmul.mubr.f32.gmra.mrb[0].mxu0 %v1707
      %v2005 = vpop.f32.mrb[0].mxu0
      %v2006 = vadd.f32 %v342, %v2005
      %v2007 = vpop.f32.mrb[0].mxu0
      %2008 = vmatprep.mubr.f32.mxu0 0.0
      %2009 = vmatmul.mubr.f32.gmra.mrb[0].mxu0 %v1708
      %v2010 = vpop.f32.mrb[0].mxu0
      %v2011 = vadd.f32 %v343, %v2010
      %v2012 = vpop.f32.mrb[0].mxu0
      %2013 = vmatprep.mubr.f32.mxu0 0.0
      %2014 = vmatmul.mubr.f32.gmra.mrb[0].mxu0 %v1709
      %v2015 = vpop.f32.mrb[0].mxu0
      %v2016 = vadd.f32 %v344, %v2015
      %v2017 = vpop.f32.mrb[0].mxu0
      %2018 = vmatprep.mubr.f32.mxu0 0.0
      %2019 = vmatmul.mubr.f32.gmra.mrb[0].mxu0 %v1710
      %v2020 = vpop.f32.mrb[0].mxu0
      %v2021 = vadd.f32 %v345, %v2020
      %v2022 = vpop.f32.mrb[0].mxu0
      %2023 = vmatprep.mubr.f32.mxu0 0.0
      %2024 = vmatmul.mubr.f32.gmra.mrb[0].mxu0 %v1711
      %v2025 = vpop.f32.mrb[0].mxu0
      %v2026 = vadd.f32 %v346, %v2025
      %v2027 = vpop.f32.mrb[0].mxu0
      %2028 = vmatprep.mubr.f32.mxu0 0.0
      %2029 = vmatmul.mubr.f32.gmra.mrb[0].mxu0 %v1712
      %v2030 = vpop.f32.mrb[0].mxu0
      %v2031 = vadd.f32 %v347, %v2030
      %v2032 = vpop.f32.mrb[0].mxu0
      %2033 = vmatprep.mubr.f32.mxu0 0.0
      %2034 = vmatmul.mubr.f32.gmra.mrb[0].mxu0 %v1713
      %v2035 = vpop.f32.mrb[0].mxu0
      %v2036 = vadd.f32 %v348, %v2035
      %v2037 = vpop.f32.mrb[0].mxu0
      %2038 = vmatprep.mubr.f32.mxu0 0.0
      %2039 = vmatmul.mubr.f32.gmra.mrb[0].mxu0 %v1714
      %v2040 = vpop.f32.mrb[0].mxu0
      %v2041 = vadd.f32 %v349, %v2040
      %v2042 = vpop.f32.mrb[0].mxu0
      %2043 = vmatprep.mubr.f32.mxu0 0.0
      %2044 = vmatmul.mubr.f32.gmra.mrb[0].mxu0 %v1715
      %v2045 = vpop.f32.mrb[0].mxu0
      %v2046 = vadd.f32 %v350, %v2045
      %v2047 = vpop.f32.mrb[0].mxu0
      %2048 = vmatprep.mubr.f32.mxu0 0.0
      %2049 = vmatmul.mubr.f32.gmra.mrb[0].mxu0 %v1716
      %v2050 = vpop.f32.mrb[0].mxu0
      %v2051 = vadd.f32 %v351, %v2050
      %v2052 = vpop.f32.mrb[0].mxu0
      %2053 = vmatprep.mubr.f32.mxu0 0.0
      %2054 = vmatmul.mubr.f32.gmra.mrb[0].mxu0 %v1717
      %v2055 = vpop.f32.mrb[0].mxu0
      %v2056 = vadd.f32 %v352, %v2055
      %v2057 = vpop.f32.mrb[0].mxu0
      %2058 = vmatprep.mubr.f32.mxu0 0.0
      %2059 = vmatmul.mubr.f32.gmra.mrb[0].mxu0 %v1718
      %v2060 = vpop.f32.mrb[0].mxu0
      %v2061 = vadd.f32 %v353, %v2060
      %v2062 = vpop.f32.mrb[0].mxu0
      %2063 = vmatprep.mubr.f32.mxu0 0.0
      %2064 = vmatmul.mubr.f32.gmra.mrb[0].mxu0 %v1719
      %v2065 = vpop.f32.mrb[0].mxu0
      %v2066 = vadd.f32 %v354, %v2065
      %v2067 = vpop.f32.mrb[0].mxu0
      %2068 = vmatprep.mubr.f32.mxu0 0.0
      %2069 = vmatmul.mubr.f32.gmra.mrb[0].mxu0 %v1720
      %v2070 = vpop.f32.mrb[0].mxu0
      %v2071 = vadd.f32 %v355, %v2070
      %v2072 = vpop.f32.mrb[0].mxu0
      %2073 = vmatprep.mubr.f32.mxu0 0.0
      %2074 = vmatmul.mubr.f32.gmra.mrb[0].mxu0 %v1721
      %v2075 = vpop.f32.mrb[0].mxu0
      %v2076 = vadd.f32 %v356, %v2075
      %v2077 = vpop.f32.mrb[0].mxu0
      %2078 = vmatprep.mubr.f32.mxu0 0.0
      %2079 = vmatmul.mubr.f32.gmra.mrb[0].mxu0 %v1722
      %v2080 = vpop.f32.mrb[0].mxu0
      %v2081 = vadd.f32 %v357, %v2080
      %v2082 = vpop.f32.mrb[0].mxu0
      %2083 = vmatprep.mubr.f32.mxu0 0.0
      %2084 = vmatmul.mubr.f32.gmra.mrb[0].mxu0 %v1723
      %v2085 = vpop.f32.mrb[0].mxu0
      %v2086 = vadd.f32 %v358, %v2085
      %v2087 = vpop.f32.mrb[0].mxu0
      %2088 = vmatprep.mubr.f32.mxu0 0.0
      %2089 = vmatmul.mubr.f32.gmra.mrb[0].mxu0 %v1724
      %v2090 = vpop.f32.mrb[0].mxu0
      %v2091 = vadd.f32 %v359, %v2090
      %v2092 = vpop.f32.mrb[0].mxu0
      %2093 = vmatprep.mubr.f32.mxu0 0.0
      %2094 = vmatmul.mubr.f32.gmra.mrb[0].mxu0 %v1725
      %v2095 = vpop.f32.mrb[0].mxu0
      %v2096 = vadd.f32 %v360, %v2095
      %v2097 = vpop.f32.mrb[0].mxu0
      %2098 = vmatprep.mubr.f32.mxu0 0.0
      %2099 = vmatmul.mubr.f32.gmra.mrb[0].mxu0 %v1726
      %v2100 = vpop.f32.mrb[0].mxu0
      %v2101 = vadd.f32 %v361, %v2100
      %v2102 = vpop.f32.mrb[0].mxu0
      %2103 = vmatprep.mubr.f32.mxu0 0.0
      %2104 = vmatmul.mubr.f32.gmra.mrb[0].mxu0 %v1727
      %v2105 = vpop.f32.mrb[0].mxu0
      %v2106 = vadd.f32 %v362, %v2105
      %v2107 = vpop.f32.mrb[0].mxu0
      %2108 = vmatprep.mubr.f32.mxu0 0.0
      %2109 = vmatmul.mubr.f32.gmra.mrb[0].mxu0 %v1728
      %v2110 = vpop.f32.mrb[0].mxu0
      %v2111 = vadd.f32 %v363, %v2110
      %v2112 = vpop.f32.mrb[0].mxu0
      %2113 = vmatprep.mubr.f32.mxu0 0.0
      %2114 = vmatmul.mubr.f32.gmra.mrb[0].mxu0 %v1729
      %v2115 = vpop.f32.mrb[0].mxu0
      %v2116 = vadd.f32 %v364, %v2115
      %v2117 = vpop.f32.mrb[0].mxu0
      %2118 = vmatprep.mubr.f32.mxu0 0.0
      %2119 = vmatmul.mubr.f32.gmra.mrb[0].mxu0 %v1730
      %v2120 = vpop.f32.mrb[0].mxu0
      %v2121 = vadd.f32 %v365, %v2120
      %v2122 = vpop.f32.mrb[0].mxu0
      %2123 = vmatprep.mubr.f32.mxu0 0.0
      %2124 = vmatmul.mubr.f32.gmra.mrb[0].mxu0 %v1731
      %v2125 = vpop.f32.mrb[0].mxu0
      %v2126 = vadd.f32 %v366, %v2125
      %v2127 = vpop.f32.mrb[0].mxu0
      %2128 = vmatprep.mubr.f32.mxu0 0.0
      %2129 = vmatmul.mubr.f32.gmra.mrb[0].mxu0 %v1732
      %v2130 = vpop.f32.mrb[0].mxu0
      %v2131 = vadd.f32 %v367, %v2130
      %v2132 = vpop.f32.mrb[0].mxu0
      %2133 = vdwg.mxu0
      %v2134 = vld [vmem:[%s6] sm:$0x1]
      %v2136 = vlaneseq
      %v2137 = vshrl.u32 %v2136, 7
      %v2138 = vsub.s32 0, %v2137
      %v2139 = vrot.slane %v2134, %v2138
      %v2141 = vadd.f32 %v1816, %v2139
      %v2142 = vadd.f32 %v1821, %v2139
      %v2143 = vadd.f32 %v1826, %v2139
      %v2144 = vadd.f32 %v1831, %v2139
      %v2145 = vadd.f32 %v1836, %v2139
      %v2146 = vadd.f32 %v1841, %v2139
      %v2147 = vadd.f32 %v1846, %v2139
      %v2148 = vadd.f32 %v1851, %v2139
      %v2149 = vadd.f32 %v1856, %v2139
      %v2150 = vadd.f32 %v1861, %v2139
      %v2151 = vadd.f32 %v1866, %v2139
      %v2152 = vadd.f32 %v1871, %v2139
      %v2153 = vadd.f32 %v1876, %v2139
      %v2154 = vadd.f32 %v1881, %v2139
      %v2155 = vadd.f32 %v1886, %v2139
      %v2156 = vadd.f32 %v1891, %v2139
      %v2157 = vadd.f32 %v1896, %v2139
      %v2158 = vadd.f32 %v1901, %v2139
      %v2159 = vadd.f32 %v1906, %v2139
      %v2160 = vadd.f32 %v1911, %v2139
      %v2161 = vadd.f32 %v1916, %v2139
      %v2162 = vadd.f32 %v1921, %v2139
      %v2163 = vadd.f32 %v1926, %v2139
      %v2164 = vadd.f32 %v1931, %v2139
      %v2165 = vadd.f32 %v1936, %v2139
      %v2166 = vadd.f32 %v1941, %v2139
      %v2167 = vadd.f32 %v1946, %v2139
      %v2168 = vadd.f32 %v1951, %v2139
      %v2169 = vadd.f32 %v1956, %v2139
      %v2170 = vadd.f32 %v1961, %v2139
      %v2171 = vadd.f32 %v1966, %v2139
      %v2172 = vadd.f32 %v1971, %v2139
      %v2173 = vadd.f32 %v1976, %v2139
      %v2174 = vadd.f32 %v1981, %v2139
      %v2175 = vadd.f32 %v1986, %v2139
      %v2176 = vadd.f32 %v1991, %v2139
      %v2177 = vadd.f32 %v1996, %v2139
      %v2178 = vadd.f32 %v2001, %v2139
      %v2179 = vadd.f32 %v2006, %v2139
      %v2180 = vadd.f32 %v2011, %v2139
      %v2181 = vadd.f32 %v2016, %v2139
      %v2182 = vadd.f32 %v2021, %v2139
      %v2183 = vadd.f32 %v2026, %v2139
      %v2184 = vadd.f32 %v2031, %v2139
      %v2185 = vadd.f32 %v2036, %v2139
      %v2186 = vadd.f32 %v2041, %v2139
      %v2187 = vadd.f32 %v2046, %v2139
      %v2188 = vadd.f32 %v2051, %v2139
      %v2189 = vadd.f32 %v2056, %v2139
      %v2190 = vadd.f32 %v2061, %v2139
      %v2191 = vadd.f32 %v2066, %v2139
      %v2192 = vadd.f32 %v2071, %v2139
      %v2193 = vadd.f32 %v2076, %v2139
      %v2194 = vadd.f32 %v2081, %v2139
      %v2195 = vadd.f32 %v2086, %v2139
      %v2196 = vadd.f32 %v2091, %v2139
      %v2197 = vadd.f32 %v2096, %v2139
      %v2198 = vadd.f32 %v2101, %v2139
      %v2199 = vadd.f32 %v2106, %v2139
      %v2200 = vadd.f32 %v2111, %v2139
      %v2201 = vadd.f32 %v2116, %v2139
      %v2202 = vadd.f32 %v2121, %v2139
      %v2203 = vadd.f32 %v2126, %v2139
      %v2204 = vadd.f32 %v2131, %v2139
      %2205 = vst.msk [vmem:[%s302] sm:$0xff] %vm1016, %v2141
      %2206 = vst.msk [vmem:[%s302 + $0x8] sm:$0xff] %vm1016, %v2142
      %2207 = vst.msk [vmem:[%s302 + $0x10] sm:$0xff] %vm1016, %v2143
      %2208 = vst.msk [vmem:[%s302 + $0x18] sm:$0xff] %vm1016, %v2144
      %2209 = vst.msk [vmem:[%s302 + $0x20] sm:$0xff] %vm1016, %v2145
      %2210 = vst.msk [vmem:[%s302 + $0x28] sm:$0xff] %vm1016, %v2146
      %2211 = vst.msk [vmem:[%s302 + $0x30] sm:$0xff] %vm1016, %v2147
      %2212 = vst.msk [vmem:[%s302 + $0x38] sm:$0xff] %vm1016, %v2148
      %2213 = vst.msk [vmem:[%s302 + $0x40] sm:$0xff] %vm1016, %v2149
      %2214 = vst.msk [vmem:[%s302 + $0x48] sm:$0xff] %vm1016, %v2150
      %2215 = vst.msk [vmem:[%s302 + $0x50] sm:$0xff] %vm1016, %v2151
      %2216 = vst.msk [vmem:[%s302 + $0x58] sm:$0xff] %vm1016, %v2152
      %2217 = vst.msk [vmem:[%s302 + $0x60] sm:$0xff] %vm1016, %v2153
      %2218 = vst.msk [vmem:[%s302 + $0x68] sm:$0xff] %vm1016, %v2154
      %2219 = vst.msk [vmem:[%s302 + $0x70] sm:$0xff] %vm1016, %v2155
      %2220 = vst.msk [vmem:[%s302 + $0x78] sm:$0xff] %vm1016, %v2156
      %2221 = vst.msk [vmem:[%s302 + $0x80] sm:$0xff] %vm1016, %v2157
      %2222 = vst.msk [vmem:[%s302 + $0x88] sm:$0xff] %vm1016, %v2158
      %2223 = vst.msk [vmem:[%s302 + $0x90] sm:$0xff] %vm1016, %v2159
      %2224 = vst.msk [vmem:[%s302 + $0x98] sm:$0xff] %vm1016, %v2160
      %2225 = vst.msk [vmem:[%s302 + $0xa0] sm:$0xff] %vm1016, %v2161
      %2226 = vst.msk [vmem:[%s302 + $0xa8] sm:$0xff] %vm1016, %v2162
      %2227 = vst.msk [vmem:[%s302 + $0xb0] sm:$0xff] %vm1016, %v2163
      %2228 = vst.msk [vmem:[%s302 + $0xb8] sm:$0xff] %vm1016, %v2164
      %2229 = vst.msk [vmem:[%s302 + $0xc0] sm:$0xff] %vm1016, %v2165
      %2230 = vst.msk [vmem:[%s302 + $0xc8] sm:$0xff] %vm1016, %v2166
      %2231 = vst.msk [vmem:[%s302 + $0xd0] sm:$0xff] %vm1016, %v2167
      %2232 = vst.msk [vmem:[%s302 + $0xd8] sm:$0xff] %vm1016, %v2168
      %2233 = vst.msk [vmem:[%s302 + $0xe0] sm:$0xff] %vm1016, %v2169
      %2234 = vst.msk [vmem:[%s302 + $0xe8] sm:$0xff] %vm1016, %v2170
      %2235 = vst.msk [vmem:[%s302 + $0xf0] sm:$0xff] %vm1016, %v2171
      %2236 = vst.msk [vmem:[%s302 + $0xf8] sm:$0xff] %vm1016, %v2172
      %2237 = vst.msk [vmem:[%s302 + $0x100] sm:$0xff] %vm1016, %v2173
      %2238 = vst.msk [vmem:[%s302 + $0x108] sm:$0xff] %vm1016, %v2174
      %2239 = vst.msk [vmem:[%s302 + $0x110] sm:$0xff] %vm1016, %v2175
      %2240 = vst.msk [vmem:[%s302 + $0x118] sm:$0xff] %vm1016, %v2176
      %2241 = vst.msk [vmem:[%s302 + $0x120] sm:$0xff] %vm1016, %v2177
      %2242 = vst.msk [vmem:[%s302 + $0x128] sm:$0xff] %vm1016, %v2178
      %2243 = vst.msk [vmem:[%s302 + $0x130] sm:$0xff] %vm1016, %v2179
      %2244 = vst.msk [vmem:[%s302 + $0x138] sm:$0xff] %vm1016, %v2180
      %2245 = vst.msk [vmem:[%s302 + $0x140] sm:$0xff] %vm1016, %v2181
      %2246 = vst.msk [vmem:[%s302 + $0x148] sm:$0xff] %vm1016, %v2182
      %2247 = vst.msk [vmem:[%s302 + $0x150] sm:$0xff] %vm1016, %v2183
      %2248 = vst.msk [vmem:[%s302 + $0x158] sm:$0xff] %vm1016, %v2184
      %2249 = vst.msk [vmem:[%s302 + $0x160] sm:$0xff] %vm1016, %v2185
      %2250 = vst.msk [vmem:[%s302 + $0x168] sm:$0xff] %vm1016, %v2186
      %2251 = vst.msk [vmem:[%s302 + $0x170] sm:$0xff] %vm1016, %v2187
      %2252 = vst.msk [vmem:[%s302 + $0x178] sm:$0xff] %vm1016, %v2188
      %2253 = vst.msk [vmem:[%s302 + $0x180] sm:$0xff] %vm1016, %v2189
      %2254 = vst.msk [vmem:[%s302 + $0x188] sm:$0xff] %vm1016, %v2190
      %2255 = vst.msk [vmem:[%s302 + $0x190] sm:$0xff] %vm1016, %v2191
      %2256 = vst.msk [vmem:[%s302 + $0x198] sm:$0xff] %vm1016, %v2192
      %2257 = vst.msk [vmem:[%s302 + $0x1a0] sm:$0xff] %vm1016, %v2193
      %2258 = vst.msk [vmem:[%s302 + $0x1a8] sm:$0xff] %vm1016, %v2194
      %2259 = vst.msk [vmem:[%s302 + $0x1b0] sm:$0xff] %vm1016, %v2195
      %2260 = vst.msk [vmem:[%s302 + $0x1b8] sm:$0xff] %vm1016, %v2196
      %2261 = vst.msk [vmem:[%s302 + $0x1c0] sm:$0xff] %vm1016, %v2197
      %2262 = vst.msk [vmem:[%s302 + $0x1c8] sm:$0xff] %vm1016, %v2198
      %2263 = vst.msk [vmem:[%s302 + $0x1d0] sm:$0xff] %vm1016, %v2199
      %2264 = vst.msk [vmem:[%s302 + $0x1d8] sm:$0xff] %vm1016, %v2200
      %2265 = vst.msk [vmem:[%s302 + $0x1e0] sm:$0xff] %vm1016, %v2201
      %2266 = vst.msk [vmem:[%s302 + $0x1e8] sm:$0xff] %vm1016, %v2202
      %2267 = vst.msk [vmem:[%s302 + $0x1f0] sm:$0xff] %vm1016, %v2203
      %2268 = vst.msk [vmem:[%s302 + $0x1f8] sm:$0xff] %vm1016, %v2204
      %s2269 = smul.u32 64, %s18
      %p2270 = scmp.lt.s32.totalorder %s2269, 127
      %s2271 = scalar_select %p2270, %s2269, 127
      %s2272 = smul.addr %s2271, 8
      %s2273 = scalar_lea.vmem %s7, %s2272
      // Predicated region
      $region49: #{tpu_custom_call.1} parent=47 // pred_check
        %p2274 = pneg %p193
      $region50: #{tpu_custom_call.1} parent=47 // pred_check_branch
        %2276 = sbr.rel (%p2274) target = $region52
      $region51: #{tpu_custom_call.1} parent=47 // pred_region
        %s2277 = smul.u32 64, %s18
      $region52: #{tpu_custom_call.1} parent=47 // pred_fallthru
        _
    $region48: #{tpu_custom_call.1} parent=5 // pred_fallthru
      _
    %p2278 = scmp.le.s32.totalorder 2, %s13
    // Predicated region
    $region53: #{tpu_custom_call.1} parent=5 // pred_check
      %p2279 = pneg %p2278
    $region54: #{tpu_custom_call.1} parent=5 // pred_check_branch
      %2281 = sbr.rel (%p2279) target = $region56
    $region55: #{tpu_custom_call.1} parent=5 // pred_region
      %s2282 = ssub.s32 %s13, 2
      // Predicated region
      $region57: #{tpu_custom_call.1} parent=55 // pred_check
        %p2283 = pneg %p199
      $region58: #{tpu_custom_call.1} parent=55 // pred_check_branch
        %2285 = sbr.rel (%p2283) target = $region60
      $region59: #{tpu_custom_call.1} parent=55 // pred_region
        %s2286 = smul.u32 64, %s19
        %p2287 = scmp.lt.s32.totalorder %s2286, 127
        %s2288 = scalar_select %p2287, %s2286, 127
        %s2289 = smul.addr %s2288, 8
        %s2290 = scalar_lea.vmem %s7, %s2289
      $region60: #{tpu_custom_call.1} parent=55 // pred_fallthru
        _
    $region56: #{tpu_custom_call.1} parent=5 // pred_fallthru
      _
  $region6: #{tpu_custom_call.1} parent=0 // loop_footer
    %s17 = sadd.s32 1, %s13
  $region7: #{tpu_custom_call.1} parent=0 // loop_footer_branch
    %12 = sbr.rel target = $region3
  $region8: #{tpu_custom_call.1} parent=0 // loop_exit
    _

</llo_original>
